<compile_context>
chip_gen: v7x
topology: tpu7x:2x2x1
jax: 0.10.0
libtpu: 0.0.40
codegen_flags: <defaults>
</compile_context>

<pallas_src>
import functools

import jax
import jax.numpy as jnp
from jax import lax
from jax.experimental import pallas as pl
from jax.experimental.pallas import tpu as pltpu

LANE = 128  # lane width / channel padding target (right for v5e/v6e/v7x)


def _round_up(x, m):
    return (x + m - 1) // m * m


def _hidden_padded(inp, expand_ratio):
    return _round_up(int(inp * expand_ratio), LANE)


# ----------------------------------------------------------------------------
# Fused kernel: 1x1 expand -> 3x3 depthwise(stride) -> 1x1 project (+ residual)
# ----------------------------------------------------------------------------
def _fused_invres_kernel(x_ref, w_exp_ref, b_exp_ref, w_dw_ref, b_dw_ref,
                         w_pt_ref, b_pj_ref, o_ref, pad_ref, *,
                         H, W, stride, hidden_p, apply_expand_act, use_res,
                         R, n_slabs):
    ho = (H - 1) // stride + 1
    wo = (W - 1) // stride + 1
    hp = hidden_p

    # ---- zero ONLY the one-pixel halo border (interior is fully rewritten
    #      below).  Done every step because a one-shot pl.when(program_id==0)
    #      init is not safe when the "parallel" batch axis is split across
    #      TensorCores (v7x megacore).
    if stride == 1:
        pad_ref[0:1, :, :] = jnp.zeros((1, W + 2, hp), jnp.float32)
        pad_ref[H + 1:H + 2, :, :] = jnp.zeros((1, W + 2, hp), jnp.float32)
        pad_ref[:, 0:1, :] = jnp.zeros((H + 2, 1, hp), jnp.float32)
        pad_ref[:, W + 1:W + 2, :] = jnp.zeros((H + 2, 1, hp), jnp.float32)
    else:
        for pr in range(2):
            for pc in range(2):
                p = 2 * pr + pc
                br = 0 if pr == 0 else ho       # border row of this parity plane
                bc = 0 if pc == 0 else wo       # border col of this parity plane
                pad_ref[p, br:br + 1, :, :] = jnp.zeros((1, wo + 1, hp), jnp.float32)
                pad_ref[p, :, bc:bc + 1, :] = jnp.zeros((ho + 1, 1, hp), jnp.float32)

    # ---- stage 1: 1x1 expansion (BN folded) + ReLU6 on the MXU.
    #      Operands stay in their HBM dtype (feed bf16 for native MXU rate);
    #      accumulate in f32.  For expand_ratio==1, w_exp is a zero-padded
    #      identity (transpose on the MXU) and bias/ReLU6 are skipped.
    x = x_ref[0]                                              # (Cin, H*W), lane-dense
    h = lax.dot_general(x, w_exp_ref[...],
                        dimension_numbers=(((0,), (0,)), ((), ())),
                        preferred_element_type=jnp.float32)   # (H*W, hidden_p)
    if apply_expand_act:
        h = jnp.clip(h + b_exp_ref[...], 0.0, 6.0)

    # ---- place h into the zero-bordered VMEM scratch (never touches HBM).
    if stride == 1:
        pad_ref[1:H + 1, 1:W + 1, :] = h.reshape(H, W, hp)
    else:
        # The wrapper delivered pixels quadrant-ordered (row parity a, col
        # parity b, i, j): store each quadrant contiguously into its padded
        # plane, so every tap below is a unit-stride window.
        h_q = h.reshape(2, 2, ho, wo, hp)
        for a in range(2):
            for b in range(2):
                pad_ref[2 * (1 - a) + (1 - b), a:a + ho, b:b + wo, :] = h_q[a, b]

    w_dw = w_dw_ref[...]                                      # (3,3,hidden_p) f32
    b_dw = b_dw_ref[...]                                      # (1,hidden_p)   f32
    w_pt = w_pt_ref[...]                                      # (Cout,hidden_p)
    b_pj = b_pj_ref[...]                                      # (Cout,1)       f32

    # ---- stages 2+3, tiled over output-row slabs so the f32 depthwise
    #      accumulator stays register-resident; projection (+ residual) writes
    #      lane-dense column slices of the (Cout, ho*wo) output block.
    def slab(s, carry):
        r0 = pl.multiple_of(s * R, R)
        acc = jnp.zeros((R, wo, hp), jnp.float32)
        for dy in range(3):                                   # static 9-tap unroll
            for dx in range(3):
                if stride == 1:
                    win = pad_ref[pl.ds(r0 + dy, R), pl.ds(dx, wo), :]
                else:
                    win = pad_ref[2 * (dy & 1) + (dx & 1),
                                  pl.ds(r0 + dy // 2, R), pl.ds(dx // 2, wo), :]
                acc = acc + win * w_dw[dy, dx]
        y = jnp.clip(acc + b_dw, 0.0, 6.0).reshape(R * wo, hp)

        # 1x1 projection (BN folded): (Cout,hidden_p) x (R*wo,hidden_p) -> (Cout,R*wo)
        out = lax.dot_general(w_pt, y.astype(w_pt.dtype),
                              dimension_numbers=(((1,), (1,)), ((), ())),
                              preferred_element_type=jnp.float32)
        out = out + b_pj
        c0 = pl.multiple_of(s * (R * wo), R * wo)
        if use_res:                                           # stride==1 and Cin==Cout
            # re-read the resident input block per slab (short live range)
            out = out + x_ref[0, :, pl.ds(c0, R * wo)].astype(jnp.float32)
        o_ref[0, :, pl.ds(c0, R * wo)] = out.astype(o_ref.dtype)
        return carry

    lax.fori_loop(0, n_slabs, slab, 0)


# ----------------------------------------------------------------------------
# Wrapper
# ----------------------------------------------------------------------------
def inverted_residual(x_nchw, folded, *, inp, outp, stride, expand_ratio,
                      row_slab=8, vmem_limit_bytes=48 * 1024 * 1024):
    """Fused MobileNetV2 InvertedResidual forward (inference, BN folded)."""
    n, cin, h, w = x_nchw.shape
    assert cin == inp
    assert stride in (1, 2)
    if stride == 2:
        assert h % 2 == 0 and w % 2 == 0, "stride-2 path assumes even H, W"
    hidden_p = _hidden_padded(inp, expand_ratio)
    has_expand = expand_ratio != 1
    use_res = (stride == 1) and (inp == outp)
    ho = (h - 1) // stride + 1
    wo = (w - 1) // stride + 1

    # Largest output-row slab <= row_slab that divides ho.
    R = next(r for r in range(min(row_slab, ho), 0, -1) if ho % r == 0)
    n_slabs = ho // R

    if stride == 1:
        x_flat = x_nchw.reshape(n, inp, h * w)        # NCHW -> (N, C, H*W), no transpose
        scratch = pltpu.VMEM((h + 2, w + 2, hidden_p), jnp.float32)
    else:
        # One-time even/odd deinterleave of the (small, pre-expansion) input so
        # all in-kernel depthwise taps are unit-stride.
        x_flat = jnp.transpose(
            x_nchw.reshape(n, inp, ho, 2, wo, 2), (0, 1, 3, 5, 2, 4)
        ).reshape(n, inp, h * w)
        scratch = pltpu.VMEM((4, ho + 1, wo + 1, hidden_p), jnp.float32)

    def whole(a):                                     # full-array block every step
        nd = a.ndim
        return pl.BlockSpec(a.shape, lambda b: (0,) * nd)

    weights = [folded["w_exp"], folded["b_exp"], folded["w_dw"],
               folded["b_dw"], folded["w_projT"], folded["b_proj"]]
    in_specs = [pl.BlockSpec((1, inp, h * w), lambda b: (b, 0, 0))]
    in_specs += [whole(a) for a in weights]

    kernel = functools.partial(
        _fused_invres_kernel, H=h, W=w, stride=stride, hidden_p=hidden_p,
        apply_expand_act=has_expand, use_res=use_res, R=R, n_slabs=n_slabs)

    out = pl.pallas_call(
        kernel,
        out_shape=jax.ShapeDtypeStruct((n, outp, ho * wo), x_nchw.dtype),
        grid=(n,),
        in_specs=in_specs,
        out_specs=pl.BlockSpec((1, outp, ho * wo), lambda b: (b, 0, 0)),
        scratch_shapes=[scratch],
        compiler_params=pltpu.CompilerParams(
            dimension_semantics=("parallel",),
            # v5e needs an explicit limit >= 32 MiB (default scoped is 16 MiB);
            # v6e/v5e can raise this to ~100 MiB for larger tiles; keep it
            # <= ~48 MiB on v7x (64 MiB physical VMEM).
            vmem_limit_bytes=vmem_limit_bytes),
    )(x_flat, *weights)
    # TODO(synk): for large feature maps (e.g. 112x112, hidden>=96) add an
    # output-row-block grid axis with a 1-row halo (memory_space=pl.ANY +
    # pltpu.make_async_copy) so the VMEM scratch is bounded on v7x and both of
    # its TensorCores get work even at batch 1.
    # TODO(synk): at tiny Cin/Cout (4 here) the 1x1 matmuls occupy <2% of an
    # MXU pass; batch several images per grid step (or do them as VPU FMAs) to
    # raise MXU occupancy.
    return out.reshape(n, outp, ho, wo)


# ----------------------------------------------------------------------------
# Parameters: raw (PyTorch-like conv + BN) and BN-folded / lane-padded layout
# ----------------------------------------------------------------------------
def _bn_params(key, c):
    k1, k2, k3, k4 = jax.random.split(key, 4)
    return dict(gamma=jax.random.uniform(k1, (c,), jnp.float32, 0.5, 1.5),
                beta=0.1 * jax.random.normal(k2, (c,), jnp.float32),
                mean=0.1 * jax.random.normal(k3, (c,), jnp.float32),
                var=jax.random.uniform(k4, (c,), jnp.float32, 0.5, 1.5))


def make_params(key, inp, outp, expand_ratio):
    hidden = int(inp * expand_ratio)
    ks = jax.random.split(key, 6)
    p = {}
    if expand_ratio != 1:
        p["w_exp"] = 0.1 * jax.random.normal(ks[0], (inp, hidden), jnp.float32)
        p["bn_exp"] = _bn_params(ks[1], hidden)
    p["w_dw"] = 0.1 * jax.random.normal(ks[2], (3, 3, hidden), jnp.float32)
    p["bn_dw"] = _bn_params(ks[3], hidden)
    p["w_proj"] = 0.1 * jax.random.normal(ks[4], (hidden, outp), jnp.float32)
    p["bn_proj"] = _bn_params(ks[5], outp)
    return p


def _bn_scale_bias(bn, eps=1e-5):
    scale = bn["gamma"] * lax.rsqrt(bn["var"] + eps)
    return scale, bn["beta"] - bn["mean"] * scale


def _pad_last(a, n):
    pad = n - a.shape[-1]
    if pad == 0:
        return a
    return jnp.pad(a, [(0, 0)] * (a.ndim - 1) + [(0, pad)])


def fold_params(raw, *, inp, outp, expand_ratio, param_dtype=jnp.float32):
    """Fold inference BN into conv weights; pad the hidden (lane) axis to 128.

    Pass param_dtype=jnp.bfloat16 (and bf16 activations) for native MXU rate /
    half the HBM traffic; the padded channels are zero so results are unchanged.
    """
    del outp
    hidden_p = _hidden_padded(inp, expand_ratio)
    f = {}
    if expand_ratio != 1:
        s, b = _bn_scale_bias(raw["bn_exp"])
        f["w_exp"] = _pad_last(raw["w_exp"] * s[None, :], hidden_p).astype(param_dtype)
        f["b_exp"] = _pad_last(b[None, :], hidden_p).astype(jnp.float32)
    else:
        # expand_ratio==1: padded identity -> (Cin,HW)->(HW,hidden) runs on the
        # MXU; bias/ReLU6 skipped in the kernel.
        f["w_exp"] = _pad_last(jnp.eye(inp, dtype=param_dtype), hidden_p)
        f["b_exp"] = jnp.zeros((1, hidden_p), jnp.float32)
    s, b = _bn_scale_bias(raw["bn_dw"])
    f["w_dw"] = _pad_last(raw["w_dw"] * s[None, None, :], hidden_p).astype(jnp.float32)
    f["b_dw"] = _pad_last(b[None, :], hidden_p).astype(jnp.float32)
    s, b = _bn_scale_bias(raw["bn_proj"])
    f["w_projT"] = _pad_last((raw["w_proj"] * s[None, :]).T, hidden_p).astype(param_dtype)
    f["b_proj"] = b[:, None].astype(jnp.float32)
    return f


# ----------------------------------------------------------------------------
# Pure-JAX reference (unfolded conv + BN, verification only)
# ----------------------------------------------------------------------------
def reference(x_nchw, raw, *, inp, outp, stride, expand_ratio, eps=1e-5):
    use_res = (stride == 1) and (inp == outp)
    dn = ("NHWC", "HWIO", "NHWC")
    hp = lax.Precision.HIGHEST

    def bn(y, p):
        return (y - p["mean"]) * (p["gamma"] * lax.rsqrt(p["var"] + eps)) + p["beta"]

    x = jnp.transpose(x_nchw, (0, 2, 3, 1))
    y = x
    if expand_ratio != 1:
        y = lax.conv_general_dilated(y, raw["w_exp"][None, None], (1, 1), "VALID",
                                     dimension_numbers=dn, precision=hp)
        y = jnp.clip(bn(y, raw["bn_exp"]), 0.0, 6.0)
    hidden = y.shape[-1]
    y = lax.conv_general_dilated(y, raw["w_dw"][:, :, None, :], (stride, stride),
                                 ((1, 1), (1, 1)), dimension_numbers=dn,
                                 feature_group_count=hidden, precision=hp)
    y = jnp.clip(bn(y, raw["bn_dw"]), 0.0, 6.0)
    y = lax.conv_general_dilated(y, raw["w_proj"][None, None], (1, 1), "VALID",
                                 dimension_numbers=dn, precision=hp)
    y = bn(y, raw["bn_proj"])
    if use_res:
        y = y + x
    return jnp.transpose(y, (0, 3, 1, 2))


if __name__ == "__main__":
    key = jax.random.PRNGKey(0)
    configs = [
        # primary spec shape: residual path active
        dict(inp=4, outp=4, stride=1, expand_ratio=6, shape=(2, 4, 16, 16)),
        # downsampling block: stride-2 quadrant path
        dict(inp=4, outp=8, stride=2, expand_ratio=6, shape=(2, 4, 16, 16)),
        # no-expand block (expand_ratio==1): MXU-identity transpose path
        dict(inp=8, outp=8, stride=1, expand_ratio=1, shape=(2, 8, 16, 16)),
    ]
    for i, cfg in enumerate(configs):
        key, kx, kp = jax.random.split(key, 3)
        x = jax.random.normal(kx, cfg["shape"], jnp.float32)   # NCHW, like PyTorch
        raw = make_params(kp, cfg["inp"], cfg["outp"], cfg["expand_ratio"])
        folded = fold_params(raw, inp=cfg["inp"], outp=cfg["outp"],
                             expand_ratio=cfg["expand_ratio"])

        out = inverted_residual(x, folded, inp=cfg["inp"], outp=cfg["outp"],
                                stride=cfg["stride"],
                                expand_ratio=cfg["expand_ratio"])
        out = jax.block_until_ready(out)

        ref = reference(x, raw, inp=cfg["inp"], outp=cfg["outp"],
                        stride=cfg["stride"], expand_ratio=cfg["expand_ratio"])
        assert out.shape == ref.shape, (i, out.shape, ref.shape)
        max_err = float(jnp.max(jnp.abs(out - ref)))
        assert jnp.allclose(out, ref, atol=1e-4, rtol=1e-4), (i, max_err)

    print("KERNEL_OK")
</pallas_src>

<mosaic_0001>
module attributes {stable_mosaic.version = 11 : i64} {
  func.func @_fused_invres_kernel(%arg0: i32, %arg1: memref<1x4x256xf32, #tpu.memory_space<vmem>>, %arg2: memref<4x128xf32, #tpu.memory_space<vmem>>, %arg3: memref<1x128xf32, #tpu.memory_space<vmem>>, %arg4: memref<3x3x128xf32, #tpu.memory_space<vmem>>, %arg5: memref<1x128xf32, #tpu.memory_space<vmem>>, %arg6: memref<4x128xf32, #tpu.memory_space<vmem>>, %arg7: memref<4x1xf32, #tpu.memory_space<vmem>>, %arg8: memref<1x4x256xf32, #tpu.memory_space<vmem>>, %arg9: memref<18x18x128xf32, #tpu.memory_space<vmem>>) attributes {dimension_semantics = [#tpu.dimension_semantics<parallel>], iteration_bounds = array<i64: 2>, scalar_prefetch = 0 : i64, scratch_operands = 1 : i64, tpu.core_type = #tpu.core_type<tc>, window_params = [{transform_indices = @transform_0, window_bounds = array<i64: 1, 4, 256>}, {pipeline_mode = #tpu.pipeline_mode<synchronous>, transform_indices = @transform_1, window_bounds = array<i64: 4, 128>}, {pipeline_mode = #tpu.pipeline_mode<synchronous>, transform_indices = @transform_2, window_bounds = array<i64: 1, 128>}, {pipeline_mode = #tpu.pipeline_mode<synchronous>, transform_indices = @transform_3, window_bounds = array<i64: 3, 3, 128>}, {pipeline_mode = #tpu.pipeline_mode<synchronous>, transform_indices = @transform_4, window_bounds = array<i64: 1, 128>}, {pipeline_mode = #tpu.pipeline_mode<synchronous>, transform_indices = @transform_5, window_bounds = array<i64: 4, 128>}, {pipeline_mode = #tpu.pipeline_mode<synchronous>, transform_indices = @transform_6, window_bounds = array<i64: 4, 1>}, {transform_indices = @transform_7, window_bounds = array<i64: 1, 4, 256>}]} {
    %cst = arith.constant 0.000000e+00 : f32
    %0 = vector.broadcast %cst : f32 to vector<1x18x128xf32>
    %c0 = arith.constant 0 : index
    %c0_0 = arith.constant 0 : index
    %c0_1 = arith.constant 0 : index
    %1 = vector.load %arg9[%c0, %c0_0, %c0_1] : memref<18x18x128xf32, #tpu.memory_space<vmem>>, vector<1x18x128xf32>
    tpu.vector_store %arg9[%c0, %c0_0, %c0_1], %0 {strides = array<i32>} : memref<18x18x128xf32, #tpu.memory_space<vmem>>, vector<1x18x128xf32>,
    %cst_2 = arith.constant 0.000000e+00 : f32
    %2 = vector.broadcast %cst_2 : f32 to vector<1x18x128xf32>
    %c17 = arith.constant 17 : index
    %c0_3 = arith.constant 0 : index
    %c0_4 = arith.constant 0 : index
    %3 = vector.load %arg9[%c17, %c0_3, %c0_4] : memref<18x18x128xf32, #tpu.memory_space<vmem>>, vector<1x18x128xf32>
    tpu.vector_store %arg9[%c17, %c0_3, %c0_4], %2 {strides = array<i32>} : memref<18x18x128xf32, #tpu.memory_space<vmem>>, vector<1x18x128xf32>,
    %cst_5 = arith.constant 0.000000e+00 : f32
    %4 = vector.broadcast %cst_5 : f32 to vector<18x1x128xf32>
    %c0_6 = arith.constant 0 : index
    %c0_7 = arith.constant 0 : index
    %c0_8 = arith.constant 0 : index
    %5 = vector.load %arg9[%c0_6, %c0_7, %c0_8] : memref<18x18x128xf32, #tpu.memory_space<vmem>>, vector<18x1x128xf32>
    tpu.vector_store %arg9[%c0_6, %c0_7, %c0_8], %4 {strides = array<i32>} : memref<18x18x128xf32, #tpu.memory_space<vmem>>, vector<18x1x128xf32>,
    %cst_9 = arith.constant 0.000000e+00 : f32
    %6 = vector.broadcast %cst_9 : f32 to vector<18x1x128xf32>
    %c0_10 = arith.constant 0 : index
    %c17_11 = arith.constant 17 : index
    %c0_12 = arith.constant 0 : index
    %7 = vector.load %arg9[%c0_10, %c17_11, %c0_12] : memref<18x18x128xf32, #tpu.memory_space<vmem>>, vector<18x1x128xf32>
    tpu.vector_store %arg9[%c0_10, %c17_11, %c0_12], %6 {strides = array<i32>} : memref<18x18x128xf32, #tpu.memory_space<vmem>>, vector<18x1x128xf32>,
    %c0_13 = arith.constant 0 : index
    %c0_14 = arith.constant 0 : index
    %c0_15 = arith.constant 0 : index
    %8 = vector.load %arg1[%c0_13, %c0_14, %c0_15] : memref<1x4x256xf32, #tpu.memory_space<vmem>>, vector<1x4x256xf32>
    %9 = vector.shape_cast %8 : vector<1x4x256xf32> to vector<4x256xf32>
    %c0_16 = arith.constant 0 : index
    %c0_17 = arith.constant 0 : index
    %10 = vector.load %arg2[%c0_16, %c0_17] : memref<4x128xf32, #tpu.memory_space<vmem>>, vector<4x128xf32>
    %cst_18 = arith.constant dense<0.000000e+00> : vector<256x128xf32>
    %11 = tpu.matmul %9, %10, %cst_18 {dimension_numbers = #tpu.dot_dimension_numbers<[0], [0], [1], [1], [0, 1, 1, 1], [], []>} : vector<4x256xf32>, vector<4x128xf32>, vector<256x128xf32> -> vector<256x128xf32>
    %c0_19 = arith.constant 0 : index
    %c0_20 = arith.constant 0 : index
    %12 = vector.load %arg3[%c0_19, %c0_20] : memref<1x128xf32, #tpu.memory_space<vmem>>, vector<1x128xf32>
    %13 = vector.broadcast %12 : vector<1x128xf32> to vector<256x128xf32>
    %14 = arith.addf %11, %13 : vector<256x128xf32>
    %cst_21 = arith.constant 0.000000e+00 : f32
    %cst_22 = arith.constant 6.000000e+00 : f32
    %15 = vector.broadcast %cst_21 : f32 to vector<256x128xf32>
    %16 = arith.maximumf %15, %14 : vector<256x128xf32>
    %17 = vector.broadcast %cst_22 : f32 to vector<256x128xf32>
    %18 = arith.minimumf %17, %16 : vector<256x128xf32>
    %19 = vector.shape_cast %18 : vector<256x128xf32> to vector<16x16x128xf32>
    %c1 = arith.constant 1 : index
    %c1_23 = arith.constant 1 : index
    %c0_24 = arith.constant 0 : index
    %20 = vector.load %arg9[%c1, %c1_23, %c0_24] : memref<18x18x128xf32, #tpu.memory_space<vmem>>, vector<16x16x128xf32>
    tpu.vector_store %arg9[%c1, %c1_23, %c0_24], %19 {strides = array<i32>} : memref<18x18x128xf32, #tpu.memory_space<vmem>>, vector<16x16x128xf32>,
    %c0_25 = arith.constant 0 : index
    %c0_26 = arith.constant 0 : index
    %c0_27 = arith.constant 0 : index
    %21 = vector.load %arg4[%c0_25, %c0_26, %c0_27] : memref<3x3x128xf32, #tpu.memory_space<vmem>>, vector<3x3x128xf32>
    %c0_28 = arith.constant 0 : index
    %c0_29 = arith.constant 0 : index
    %22 = vector.load %arg5[%c0_28, %c0_29] : memref<1x128xf32, #tpu.memory_space<vmem>>, vector<1x128xf32>
    %c0_30 = arith.constant 0 : index
    %c0_31 = arith.constant 0 : index
    %23 = vector.load %arg6[%c0_30, %c0_31] : memref<4x128xf32, #tpu.memory_space<vmem>>, vector<4x128xf32>
    %c0_32 = arith.constant 0 : index
    %c0_33 = arith.constant 0 : index
    %24 = vector.load %arg7[%c0_32, %c0_33] : memref<4x1xf32, #tpu.memory_space<vmem>>, vector<4x1xf32>
    %c0_i32 = arith.constant 0 : i32
    %c2_i32 = arith.constant 2 : i32
    %25 = arith.addi %c0_i32, %c2_i32 : i32
    %c1_i32 = arith.constant 1 : i32
    scf.for %arg10 = %c0_i32 to %25 step %c1_i32  : i32 {
      %c8_i32 = arith.constant 8 : i32
      %26 = arith.muli %arg10, %c8_i32 : i32
      %27 = tpu.assume_multiple %26, 8 : i32
      %cst_35 = arith.constant 0.000000e+00 : f32
      %28 = vector.broadcast %cst_35 : f32 to vector<8x16x128xf32>
      %c0_i32_36 = arith.constant 0 : i32
      %29 = arith.addi %27, %c0_i32_36 : i32
      %30 = arith.index_cast %29 : i32 to index
      %c0_37 = arith.constant 0 : index
      %c0_38 = arith.constant 0 : index
      %31 = vector.load %arg9[%30, %c0_37, %c0_38] : memref<18x18x128xf32, #tpu.memory_space<vmem>>, vector<8x16x128xf32>
      %32 = vector.extract_strided_slice %21 {offsets = [0, 0, 0], sizes = [1, 1, 128], strides = [1, 1, 1]} : vector<3x3x128xf32> to vector<1x1x128xf32>
      %33 = vector.shape_cast %32 : vector<1x1x128xf32> to vector<128xf32>
      %34 = vector.shape_cast %33 : vector<128xf32> to vector<1x1x128xf32>
      %35 = vector.broadcast %34 : vector<1x1x128xf32> to vector<8x16x128xf32>
      %36 = arith.mulf %31, %35 : vector<8x16x128xf32>
      %37 = arith.addf %28, %36 : vector<8x16x128xf32>
      %c0_i32_39 = arith.constant 0 : i32
      %38 = arith.addi %27, %c0_i32_39 : i32
      %39 = arith.index_cast %38 : i32 to index
      %c1_40 = arith.constant 1 : index
      %c0_41 = arith.constant 0 : index
      %40 = vector.load %arg9[%39, %c1_40, %c0_41] : memref<18x18x128xf32, #tpu.memory_space<vmem>>, vector<8x16x128xf32>
      %41 = vector.extract_strided_slice %21 {offsets = [0, 1, 0], sizes = [1, 1, 128], strides = [1, 1, 1]} : vector<3x3x128xf32> to vector<1x1x128xf32>
      %42 = vector.shape_cast %41 : vector<1x1x128xf32> to vector<128xf32>
      %43 = vector.shape_cast %42 : vector<128xf32> to vector<1x1x128xf32>
      %44 = vector.broadcast %43 : vector<1x1x128xf32> to vector<8x16x128xf32>
      %45 = arith.mulf %40, %44 : vector<8x16x128xf32>
      %46 = arith.addf %37, %45 : vector<8x16x128xf32>
      %c0_i32_42 = arith.constant 0 : i32
      %47 = arith.addi %27, %c0_i32_42 : i32
      %48 = arith.index_cast %47 : i32 to index
      %c2 = arith.constant 2 : index
      %c0_43 = arith.constant 0 : index
      %49 = vector.load %arg9[%48, %c2, %c0_43] : memref<18x18x128xf32, #tpu.memory_space<vmem>>, vector<8x16x128xf32>
      %50 = vector.extract_strided_slice %21 {offsets = [0, 2, 0], sizes = [1, 1, 128], strides = [1, 1, 1]} : vector<3x3x128xf32> to vector<1x1x128xf32>
      %51 = vector.shape_cast %50 : vector<1x1x128xf32> to vector<128xf32>
      %52 = vector.shape_cast %51 : vector<128xf32> to vector<1x1x128xf32>
      %53 = vector.broadcast %52 : vector<1x1x128xf32> to vector<8x16x128xf32>
      %54 = arith.mulf %49, %53 : vector<8x16x128xf32>
      %55 = arith.addf %46, %54 : vector<8x16x128xf32>
      %c1_i32_44 = arith.constant 1 : i32
      %56 = arith.addi %27, %c1_i32_44 : i32
      %57 = arith.index_cast %56 : i32 to index
      %c0_45 = arith.constant 0 : index
      %c0_46 = arith.constant 0 : index
      %58 = vector.load %arg9[%57, %c0_45, %c0_46] : memref<18x18x128xf32, #tpu.memory_space<vmem>>, vector<8x16x128xf32>
      %59 = vector.extract_strided_slice %21 {offsets = [1, 0, 0], sizes = [1, 1, 128], strides = [1, 1, 1]} : vector<3x3x128xf32> to vector<1x1x128xf32>
      %60 = vector.shape_cast %59 : vector<1x1x128xf32> to vector<128xf32>
      %61 = vector.shape_cast %60 : vector<128xf32> to vector<1x1x128xf32>
      %62 = vector.broadcast %61 : vector<1x1x128xf32> to vector<8x16x128xf32>
      %63 = arith.mulf %58, %62 : vector<8x16x128xf32>
      %64 = arith.addf %55, %63 : vector<8x16x128xf32>
      %c1_i32_47 = arith.constant 1 : i32
      %65 = arith.addi %27, %c1_i32_47 : i32
      %66 = arith.index_cast %65 : i32 to index
      %c1_48 = arith.constant 1 : index
      %c0_49 = arith.constant 0 : index
      %67 = vector.load %arg9[%66, %c1_48, %c0_49] : memref<18x18x128xf32, #tpu.memory_space<vmem>>, vector<8x16x128xf32>
      %68 = vector.extract_strided_slice %21 {offsets = [1, 1, 0], sizes = [1, 1, 128], strides = [1, 1, 1]} : vector<3x3x128xf32> to vector<1x1x128xf32>
      %69 = vector.shape_cast %68 : vector<1x1x128xf32> to vector<128xf32>
      %70 = vector.shape_cast %69 : vector<128xf32> to vector<1x1x128xf32>
      %71 = vector.broadcast %70 : vector<1x1x128xf32> to vector<8x16x128xf32>
      %72 = arith.mulf %67, %71 : vector<8x16x128xf32>
      %73 = arith.addf %64, %72 : vector<8x16x128xf32>
      %c1_i32_50 = arith.constant 1 : i32
      %74 = arith.addi %27, %c1_i32_50 : i32
      %75 = arith.index_cast %74 : i32 to index
      %c2_51 = arith.constant 2 : index
      %c0_52 = arith.constant 0 : index
      %76 = vector.load %arg9[%75, %c2_51, %c0_52] : memref<18x18x128xf32, #tpu.memory_space<vmem>>, vector<8x16x128xf32>
      %77 = vector.extract_strided_slice %21 {offsets = [1, 2, 0], sizes = [1, 1, 128], strides = [1, 1, 1]} : vector<3x3x128xf32> to vector<1x1x128xf32>
      %78 = vector.shape_cast %77 : vector<1x1x128xf32> to vector<128xf32>
      %79 = vector.shape_cast %78 : vector<128xf32> to vector<1x1x128xf32>
      %80 = vector.broadcast %79 : vector<1x1x128xf32> to vector<8x16x128xf32>
      %81 = arith.mulf %76, %80 : vector<8x16x128xf32>
      %82 = arith.addf %73, %81 : vector<8x16x128xf32>
      %c2_i32_53 = arith.constant 2 : i32
      %83 = arith.addi %27, %c2_i32_53 : i32
      %84 = arith.index_cast %83 : i32 to index
      %c0_54 = arith.constant 0 : index
      %c0_55 = arith.constant 0 : index
      %85 = vector.load %arg9[%84, %c0_54, %c0_55] : memref<18x18x128xf32, #tpu.memory_space<vmem>>, vector<8x16x128xf32>
      %86 = vector.extract_strided_slice %21 {offsets = [2, 0, 0], sizes = [1, 1, 128], strides = [1, 1, 1]} : vector<3x3x128xf32> to vector<1x1x128xf32>
      %87 = vector.shape_cast %86 : vector<1x1x128xf32> to vector<128xf32>
      %88 = vector.shape_cast %87 : vector<128xf32> to vector<1x1x128xf32>
      %89 = vector.broadcast %88 : vector<1x1x128xf32> to vector<8x16x128xf32>
      %90 = arith.mulf %85, %89 : vector<8x16x128xf32>
      %91 = arith.addf %82, %90 : vector<8x16x128xf32>
      %c2_i32_56 = arith.constant 2 : i32
      %92 = arith.addi %27, %c2_i32_56 : i32
      %93 = arith.index_cast %92 : i32 to index
      %c1_57 = arith.constant 1 : index
      %c0_58 = arith.constant 0 : index
      %94 = vector.load %arg9[%93, %c1_57, %c0_58] : memref<18x18x128xf32, #tpu.memory_space<vmem>>, vector<8x16x128xf32>
      %95 = vector.extract_strided_slice %21 {offsets = [2, 1, 0], sizes = [1, 1, 128], strides = [1, 1, 1]} : vector<3x3x128xf32> to vector<1x1x128xf32>
      %96 = vector.shape_cast %95 : vector<1x1x128xf32> to vector<128xf32>
      %97 = vector.shape_cast %96 : vector<128xf32> to vector<1x1x128xf32>
      %98 = vector.broadcast %97 : vector<1x1x128xf32> to vector<8x16x128xf32>
      %99 = arith.mulf %94, %98 : vector<8x16x128xf32>
      %100 = arith.addf %91, %99 : vector<8x16x128xf32>
      %c2_i32_59 = arith.constant 2 : i32
      %101 = arith.addi %27, %c2_i32_59 : i32
      %102 = arith.index_cast %101 : i32 to index
      %c2_60 = arith.constant 2 : index
      %c0_61 = arith.constant 0 : index
      %103 = vector.load %arg9[%102, %c2_60, %c0_61] : memref<18x18x128xf32, #tpu.memory_space<vmem>>, vector<8x16x128xf32>
      %104 = vector.extract_strided_slice %21 {offsets = [2, 2, 0], sizes = [1, 1, 128], strides = [1, 1, 1]} : vector<3x3x128xf32> to vector<1x1x128xf32>
      %105 = vector.shape_cast %104 : vector<1x1x128xf32> to vector<128xf32>
      %106 = vector.shape_cast %105 : vector<128xf32> to vector<1x1x128xf32>
      %107 = vector.broadcast %106 : vector<1x1x128xf32> to vector<8x16x128xf32>
      %108 = arith.mulf %103, %107 : vector<8x16x128xf32>
      %109 = arith.addf %100, %108 : vector<8x16x128xf32>
      %110 = vector.shape_cast %22 : vector<1x128xf32> to vector<1x1x128xf32>
      %111 = vector.broadcast %110 : vector<1x1x128xf32> to vector<8x16x128xf32>
      %112 = arith.addf %109, %111 : vector<8x16x128xf32>
      %cst_62 = arith.constant 0.000000e+00 : f32
      %cst_63 = arith.constant 6.000000e+00 : f32
      %113 = vector.broadcast %cst_62 : f32 to vector<8x16x128xf32>
      %114 = arith.maximumf %113, %112 : vector<8x16x128xf32>
      %115 = vector.broadcast %cst_63 : f32 to vector<8x16x128xf32>
      %116 = arith.minimumf %115, %114 : vector<8x16x128xf32>
      %117 = vector.shape_cast %116 : vector<8x16x128xf32> to vector<128x128xf32>
      %cst_64 = arith.constant dense<0.000000e+00> : vector<4x128xf32>
      %118 = tpu.matmul %23, %117, %cst_64 {dimension_numbers = #tpu.dot_dimension_numbers<[1], [1], [0], [0], [0, 0, 1, 0], [], []>} : vector<4x128xf32>, vector<128x128xf32>, vector<4x128xf32> -> vector<4x128xf32>
      %119 = vector.broadcast %24 : vector<4x1xf32> to vector<4x128xf32>
      %120 = arith.addf %118, %119 : vector<4x128xf32>
      %c128_i32 = arith.constant 128 : i32
      %121 = arith.muli %arg10, %c128_i32 : i32
      %122 = tpu.assume_multiple %121, 128 : i32
      %c0_65 = arith.constant 0 : index
      %c0_66 = arith.constant 0 : index
      %123 = arith.index_cast %122 : i32 to index
      %124 = vector.load %arg1[%c0_65, %c0_66, %123] : memref<1x4x256xf32, #tpu.memory_space<vmem>>, vector<1x4x128xf32>
      %125 = vector.shape_cast %124 : vector<1x4x128xf32> to vector<4x128xf32>
      %126 = arith.addf %120, %125 : vector<4x128xf32>
      %c0_67 = arith.constant 0 : index
      %c0_68 = arith.constant 0 : index
      %127 = arith.index_cast %122 : i32 to index
      %128 = vector.load %arg8[%c0_67, %c0_68, %127] : memref<1x4x256xf32, #tpu.memory_space<vmem>>, vector<1x4x128xf32>
      %129 = vector.shape_cast %128 : vector<1x4x128xf32> to vector<4x128xf32>
      %130 = vector.shape_cast %126 : vector<4x128xf32> to vector<1x4x128xf32>
      tpu.vector_store %arg8[%c0_67, %c0_68, %127], %130 {strides = array<i32>} : memref<1x4x256xf32, #tpu.memory_space<vmem>>, vector<1x4x128xf32>,
    }
    %c2_i32_34 = arith.constant 2 : i32
    return
  }
  func.func @transform_0(%arg0: i32) -> (i32, i32, i32) {
    %c0_i32 = arith.constant 0 : i32
    %c0_i32_0 = arith.constant 0 : i32
    %c0_i32_1 = arith.constant 0 : i32
    return %arg0, %c0_i32, %c0_i32_0 : i32, i32, i32
  }
  func.func @transform_1(%arg0: i32) -> (i32, i32) {
    %c0_i32 = arith.constant 0 : i32
    %c0_i32_0 = arith.constant 0 : i32
    %c0_i32_1 = arith.constant 0 : i32
    return %c0_i32, %c0_i32_0 : i32, i32
  }
  func.func @transform_2(%arg0: i32) -> (i32, i32) {
    %c0_i32 = arith.constant 0 : i32
    %c0_i32_0 = arith.constant 0 : i32
    %c0_i32_1 = arith.constant 0 : i32
    return %c0_i32, %c0_i32_0 : i32, i32
  }
  func.func @transform_3(%arg0: i32) -> (i32, i32, i32) {
    %c0_i32 = arith.constant 0 : i32
    %c0_i32_0 = arith.constant 0 : i32
    %c0_i32_1 = arith.constant 0 : i32
    %c0_i32_2 = arith.constant 0 : i32
    return %c0_i32, %c0_i32_0, %c0_i32_1 : i32, i32, i32
  }
  func.func @transform_4(%arg0: i32) -> (i32, i32) {
    %c0_i32 = arith.constant 0 : i32
    %c0_i32_0 = arith.constant 0 : i32
    %c0_i32_1 = arith.constant 0 : i32
    return %c0_i32, %c0_i32_0 : i32, i32
  }
  func.func @transform_5(%arg0: i32) -> (i32, i32) {
    %c0_i32 = arith.constant 0 : i32
    %c0_i32_0 = arith.constant 0 : i32
    %c0_i32_1 = arith.constant 0 : i32
    return %c0_i32, %c0_i32_0 : i32, i32
  }
  func.func @transform_6(%arg0: i32) -> (i32, i32) {
    %c0_i32 = arith.constant 0 : i32
    %c0_i32_0 = arith.constant 0 : i32
    %c0_i32_1 = arith.constant 0 : i32
    return %c0_i32, %c0_i32_0 : i32, i32
  }
  func.func @transform_7(%arg0: i32) -> (i32, i32, i32) {
    %c0_i32 = arith.constant 0 : i32
    %c0_i32_0 = arith.constant 0 : i32
    %c0_i32_1 = arith.constant 0 : i32
    return %arg0, %c0_i32, %c0_i32_0 : i32, i32, i32
  }
}

</mosaic_0001>

<llo_original>
// kernel: tpu_custom_call.1
$region0: #{tpu_custom_call.1}
  #allocation0 [shape = 'u32[]', space=smem, size = 0x4, offset = 0x4, fixed_abs, tag = 'smem constant byte address 0x4 - core index']
  #allocation1 [shape = 'u32[144,128]{1,0:T(1,128)}', space=vmem, size = 0x12000, scoped, tag = 'internal scratch']
  #allocation2 [shape = 'f32[18,18,128]{2,1,0:T(8,128)}', space=vmem, size = 0x36000, scoped, tag = 'scratch operand']
  %s0 = inlined_call_operand.hbm [shape: f32[2,4,256], index: 0, kind: input, shape index: {}]
  %s1 = inlined_call_operand.vmem [shape: f32[4,128], index: 1, kind: input, shape index: {}]
  %s2 = inlined_call_operand.hbm [shape: f32[1,128], index: 2, kind: input, shape index: {}]
  %s3 = inlined_call_operand.vmem [shape: f32[3,3,128], index: 3, kind: input, shape index: {}]
  %s4 = inlined_call_operand.hbm [shape: f32[1,128], index: 4, kind: input, shape index: {}]
  %s5 = inlined_call_operand.vmem [shape: f32[4,128], index: 5, kind: input, shape index: {}]
  %s6 = inlined_call_operand.vmem [shape: f32[4,1], index: 6, kind: input, shape index: {}]
  %s7 = inlined_call_operand.hbm [shape: f32[2,4,256], index: 7, kind: output, shape index: {}]
  %s8 = sld [smem:[#allocation0]]
  $region80: #{tpu_custom_call.1} parent=0
    _
  %s10 = ssub.s32 1, %s8
  %s11 = scalar_select 0, %s10, %s8
  $region1: #{tpu_custom_call.1} parent=0
    #allocation3 [shape = 'u8[8192]{0}', space=vmem, size = 0x2000, scoped, tag = 'input window, operand 0']
    #allocation4 [shape = 's32[2]{0}', space=sflag, size = 0x8, scoped, tag = 'scoped memory for tpu_custom_call.1']
    #allocation5 [shape = 's32[2]{0}', space=sflag, size = 0x8, scoped, tag = 'scoped memory for tpu_custom_call.1']
    #allocation6 [shape = 'u8[512]{0}', space=vmem, size = 0x400, scoped, tag = 'input window, operand 2, single buffered']
    #allocation7 [shape = 's32[1]{0}', space=sflag, size = 0x4, scoped, tag = 'scoped memory for tpu_custom_call.1']
    #allocation8 [shape = 'u8[512]{0}', space=vmem, size = 0x400, scoped, tag = 'input window, operand 4, single buffered']
    #allocation9 [shape = 'u8[8192]{0}', space=vmem, size = 0x2000, scoped, tag = 'output window, operand 0']
    %12 = vsyncpa [#allocation4], 0
    %s13 = scalar_lea.sflag [#allocation4], 1
    %14 = vsyncpa %s13, 0
    %15 = vsyncpa [#allocation7], 0
    %16 = vsyncpa [#allocation5], 0
    %s17 = scalar_lea.sflag [#allocation5], 1
    %18 = vsyncpa %s17, 0
    loop: start=0, step=1, limit=4
    $region2: #{tpu_custom_call.1} parent=1 // loop_pre_header
      _
    $region3: #{tpu_custom_call.1} parent=1 // loop_header
      %s20 = sphi 0, %s24
      %p21 = scmp.ge.s32.totalorder %s20, 4
      %s30 = sphi 0, %s32
      %s33 = sphi 0, %s30
      %s34 = sphi 0, %s33
      %s50 = sphi 0, %s34
      %s54 = sphi 0, %s54
      %s56 = sphi 0, %s54
      %s57 = sphi 0, %s56
      %s71 = sphi 0, %s57
      %s75 = sphi 0, %s75
      %s77 = sphi 0, %s75
      %s78 = sphi 0, %s77
      %s92 = sphi 0, %s78
      %s96 = sphi 0, %s96
      %s98 = sphi 0, %s96
      %s99 = sphi 0, %s98
      %s113 = sphi 0, %s99
      %s117 = sphi 0, %s117
      %s119 = sphi 0, %s117
      %s120 = sphi 0, %s119
      %s134 = sphi 0, %s120
      %s138 = sphi 0, %s138
      %s140 = sphi 0, %s138
      %s141 = sphi 0, %s140
      %s155 = sphi 0, %s141
      %s159 = sphi 0, %s159
      %s161 = sphi 0, %s159
      %s162 = sphi 0, %s161
      %s176 = sphi 0, %s162
      %s182 = sphi 0, %s184
      %s185 = sphi 0, %s182
      %s186 = sphi 0, %s185
      %s202 = sphi 0, %s186
    $region4: #{tpu_custom_call.1} parent=1 // loop_header_branch
      %23 = sbr.rel (%p21) target = $region8
    $region5: #{tpu_custom_call.1} parent=1 // loop_body
      %s25 = ssub.s32 %s20, 1
      %s26 = ssub.s32 %s20, 2
      %s27 = sadd.s32 %s20, 1
      %s28 = ssub.s32 %s20, %s27
      %p29 = scmp.eq.s32.totalorder %s28, 0
      %s31 = sadd.s32 %s30, 1
      %s32 = scalar_select %p29, %s30, %s31
      %p35 = pneg %p29
      %p36 = scmp.eq.s32.totalorder %s20, 1
      %p37 = por %p35, %p36
      %p38 = scmp.ne.s32.totalorder %s30, %s33
      %p39 = scmp.eq.s32.totalorder %s20, 0
      %p40 = por %p38, %p39
      %p41 = scmp.ne.s32.totalorder %s30, %s33
      %p42 = scmp.eq.s32.totalorder %s25, 1
      %p43 = por %p41, %p42
      %p44 = scmp.ne.s32.totalorder %s33, %s34
      %p45 = scmp.eq.s32.totalorder %s25, 0
      %p46 = por %p44, %p45
      %p47 = scmp.ne.s32.totalorder %s33, %s34
      %p48 = scmp.eq.s32.totalorder %s26, 1
      %p49 = por %p47, %p48
      %p51 = scmp.ne.s32.totalorder %s34, %s50
      %p52 = scmp.eq.s32.totalorder %s26, 0
      %p53 = por %p51, %p52
      %s55 = sadd.s32 %s54, 1
      %p58 = scmp.eq.s32.totalorder %s20, 1
      %p59 = scmp.ne.s32.totalorder %s54, %s56
      %p60 = scmp.eq.s32.totalorder %s20, 0
      %p61 = por %p59, %p60
      %p62 = scmp.ne.s32.totalorder %s54, %s56
      %p63 = scmp.eq.s32.totalorder %s25, 1
      %p64 = por %p62, %p63
      %p65 = scmp.ne.s32.totalorder %s56, %s57
      %p66 = scmp.eq.s32.totalorder %s25, 0
      %p67 = por %p65, %p66
      %p68 = scmp.ne.s32.totalorder %s56, %s57
      %p69 = scmp.eq.s32.totalorder %s26, 1
      %p70 = por %p68, %p69
      %p72 = scmp.ne.s32.totalorder %s57, %s71
      %p73 = scmp.eq.s32.totalorder %s26, 0
      %p74 = por %p72, %p73
      %s76 = sadd.s32 %s75, 1
      %p79 = scmp.eq.s32.totalorder %s20, 1
      %p80 = scmp.ne.s32.totalorder %s75, %s77
      %p81 = scmp.eq.s32.totalorder %s20, 0
      %p82 = por %p80, %p81
      %p83 = scmp.ne.s32.totalorder %s75, %s77
      %p84 = scmp.eq.s32.totalorder %s25, 1
      %p85 = por %p83, %p84
      %p86 = scmp.ne.s32.totalorder %s77, %s78
      %p87 = scmp.eq.s32.totalorder %s25, 0
      %p88 = por %p86, %p87
      %p89 = scmp.ne.s32.totalorder %s77, %s78
      %p90 = scmp.eq.s32.totalorder %s26, 1
      %p91 = por %p89, %p90
      %p93 = scmp.ne.s32.totalorder %s78, %s92
      %p94 = scmp.eq.s32.totalorder %s26, 0
      %p95 = por %p93, %p94
      %s97 = sadd.s32 %s96, 1
      %p100 = scmp.eq.s32.totalorder %s20, 1
      %p101 = scmp.ne.s32.totalorder %s96, %s98
      %p102 = scmp.eq.s32.totalorder %s20, 0
      %p103 = por %p101, %p102
      %p104 = scmp.ne.s32.totalorder %s96, %s98
      %p105 = scmp.eq.s32.totalorder %s25, 1
      %p106 = por %p104, %p105
      %p107 = scmp.ne.s32.totalorder %s98, %s99
      %p108 = scmp.eq.s32.totalorder %s25, 0
      %p109 = por %p107, %p108
      %p110 = scmp.ne.s32.totalorder %s98, %s99
      %p111 = scmp.eq.s32.totalorder %s26, 1
      %p112 = por %p110, %p111
      %p114 = scmp.ne.s32.totalorder %s99, %s113
      %p115 = scmp.eq.s32.totalorder %s26, 0
      %p116 = por %p114, %p115
      %s118 = sadd.s32 %s117, 1
      %p121 = scmp.eq.s32.totalorder %s20, 1
      %p122 = scmp.ne.s32.totalorder %s117, %s119
      %p123 = scmp.eq.s32.totalorder %s20, 0
      %p124 = por %p122, %p123
      %p125 = scmp.ne.s32.totalorder %s117, %s119
      %p126 = scmp.eq.s32.totalorder %s25, 1
      %p127 = por %p125, %p126
      %p128 = scmp.ne.s32.totalorder %s119, %s120
      %p129 = scmp.eq.s32.totalorder %s25, 0
      %p130 = por %p128, %p129
      %p131 = scmp.ne.s32.totalorder %s119, %s120
      %p132 = scmp.eq.s32.totalorder %s26, 1
      %p133 = por %p131, %p132
      %p135 = scmp.ne.s32.totalorder %s120, %s134
      %p136 = scmp.eq.s32.totalorder %s26, 0
      %p137 = por %p135, %p136
      %s139 = sadd.s32 %s138, 1
      %p142 = scmp.eq.s32.totalorder %s20, 1
      %p143 = scmp.ne.s32.totalorder %s138, %s140
      %p144 = scmp.eq.s32.totalorder %s20, 0
      %p145 = por %p143, %p144
      %p146 = scmp.ne.s32.totalorder %s138, %s140
      %p147 = scmp.eq.s32.totalorder %s25, 1
      %p148 = por %p146, %p147
      %p149 = scmp.ne.s32.totalorder %s140, %s141
      %p150 = scmp.eq.s32.totalorder %s25, 0
      %p151 = por %p149, %p150
      %p152 = scmp.ne.s32.totalorder %s140, %s141
      %p153 = scmp.eq.s32.totalorder %s26, 1
      %p154 = por %p152, %p153
      %p156 = scmp.ne.s32.totalorder %s141, %s155
      %p157 = scmp.eq.s32.totalorder %s26, 0
      %p158 = por %p156, %p157
      %s160 = sadd.s32 %s159, 1
      %p163 = scmp.eq.s32.totalorder %s20, 1
      %p164 = scmp.ne.s32.totalorder %s159, %s161
      %p165 = scmp.eq.s32.totalorder %s20, 0
      %p166 = por %p164, %p165
      %p167 = scmp.ne.s32.totalorder %s159, %s161
      %p168 = scmp.eq.s32.totalorder %s25, 1
      %p169 = por %p167, %p168
      %p170 = scmp.ne.s32.totalorder %s161, %s162
      %p171 = scmp.eq.s32.totalorder %s25, 0
      %p172 = por %p170, %p171
      %p173 = scmp.ne.s32.totalorder %s161, %s162
      %p174 = scmp.eq.s32.totalorder %s26, 1
      %p175 = por %p173, %p174
      %p177 = scmp.ne.s32.totalorder %s162, %s176
      %p178 = scmp.eq.s32.totalorder %s26, 0
      %p179 = por %p177, %p178
      %s180 = ssub.s32 %s20, %s27
      %p181 = scmp.eq.s32.totalorder %s180, 0
      %s183 = sadd.s32 %s182, 1
      %s184 = scalar_select %p181, %s182, %s183
      %p187 = pneg %p181
      %p188 = scmp.eq.s32.totalorder %s20, 1
      %p189 = por %p187, %p188
      %p190 = scmp.ne.s32.totalorder %s182, %s185
      %p191 = scmp.eq.s32.totalorder %s20, 0
      %p192 = por %p190, %p191
      %p193 = scmp.ne.s32.totalorder %s182, %s185
      %p194 = scmp.eq.s32.totalorder %s25, 1
      %p195 = por %p193, %p194
      %p196 = scmp.ne.s32.totalorder %s185, %s186
      %p197 = scmp.eq.s32.totalorder %s25, 0
      %p198 = por %p196, %p197
      %p199 = scmp.ne.s32.totalorder %s185, %s186
      %p200 = scmp.eq.s32.totalorder %s26, 1
      %p201 = por %p199, %p200
      %p203 = scmp.ne.s32.totalorder %s186, %s202
      %p204 = scmp.eq.s32.totalorder %s26, 0
      %p205 = por %p203, %p204
      %p206 = scmp.le.s32.totalorder 1, %s20
      %p207 = scmp.lt.s32.totalorder %s20, 3
      %p208 = pnand %p206, %p207
      %p209 = pneg %p208
      // Predicated region
      $region9: #{tpu_custom_call.1} parent=5 // pred_check
        _
      $region10: #{tpu_custom_call.1} parent=5 // pred_check_branch
        %211 = sbr.rel (%p208) target = $region12
      $region11: #{tpu_custom_call.1} parent=5 // pred_region
        %s212 = ssub.s32 %s20, 1
        // Predicated region
        $region13: #{tpu_custom_call.1} parent=11 // pred_check
          %p213 = pneg %p67
        $region14: #{tpu_custom_call.1} parent=11 // pred_check_branch
          %215 = sbr.rel (%p213) target = $region16
        $region15: #{tpu_custom_call.1} parent=11 // pred_region
          _
        $region16: #{tpu_custom_call.1} parent=11 // pred_fallthru
          _
        // Predicated region
        $region17: #{tpu_custom_call.1} parent=11 // pred_check
          %p216 = pneg %p88
        $region18: #{tpu_custom_call.1} parent=11 // pred_check_branch
          %218 = sbr.rel (%p216) target = $region20
        $region19: #{tpu_custom_call.1} parent=11 // pred_region
          %s220 = ssub.s32 16, 16
          %221 = vsyncadd [#allocation7], %s220
          %s223 = sshll.u32 [#allocation6], 4
          %s224 = int_to_ptr.vmem [resolvable:$true] %s223
          %226 = dma.hbm_to_vmem [thread:$0]  %s2, 16, %s224, [#allocation7]
        $region20: #{tpu_custom_call.1} parent=11 // pred_fallthru
          _
        // Predicated region
        $region21: #{tpu_custom_call.1} parent=11 // pred_check
          %p227 = pneg %p109
        $region22: #{tpu_custom_call.1} parent=11 // pred_check_branch
          %229 = sbr.rel (%p227) target = $region24
        $region23: #{tpu_custom_call.1} parent=11 // pred_region
          _
        $region24: #{tpu_custom_call.1} parent=11 // pred_fallthru
          _
        // Predicated region
        $region25: #{tpu_custom_call.1} parent=11 // pred_check
          %p230 = pneg %p130
        $region26: #{tpu_custom_call.1} parent=11 // pred_check_branch
          %232 = sbr.rel (%p230) target = $region28
        $region27: #{tpu_custom_call.1} parent=11 // pred_region
          %s234 = ssub.s32 16, 16
          %235 = vsyncadd [#allocation7], %s234
          %s237 = sshll.u32 [#allocation8], 4
          %s238 = int_to_ptr.vmem [resolvable:$true] %s237
          %240 = dma.hbm_to_vmem [thread:$0]  %s4, 16, %s238, [#allocation7]
        $region28: #{tpu_custom_call.1} parent=11 // pred_fallthru
          _
        // Predicated region
        $region29: #{tpu_custom_call.1} parent=11 // pred_check
          %p241 = pneg %p151
        $region30: #{tpu_custom_call.1} parent=11 // pred_check_branch
          %243 = sbr.rel (%p241) target = $region32
        $region31: #{tpu_custom_call.1} parent=11 // pred_region
          _
        $region32: #{tpu_custom_call.1} parent=11 // pred_fallthru
          _
        // Predicated region
        $region33: #{tpu_custom_call.1} parent=11 // pred_check
          %p244 = pneg %p172
        $region34: #{tpu_custom_call.1} parent=11 // pred_check_branch
          %246 = sbr.rel (%p244) target = $region36
        $region35: #{tpu_custom_call.1} parent=11 // pred_region
          _
        $region36: #{tpu_custom_call.1} parent=11 // pred_fallthru
          _
      $region12: #{tpu_custom_call.1} parent=5 // pred_fallthru
        _
      %p247 = scmp.lt.s32.totalorder %s20, 2
      // Predicated region
      $region37: #{tpu_custom_call.1} parent=5 // pred_check
        %p248 = pneg %p247
      $region38: #{tpu_custom_call.1} parent=5 // pred_check_branch
        %250 = sbr.rel (%p248) target = $region40
      $region39: #{tpu_custom_call.1} parent=5 // pred_region
        // Predicated region
        $region41: #{tpu_custom_call.1} parent=39 // pred_check
          %p251 = pneg %p40
        $region42: #{tpu_custom_call.1} parent=39 // pred_check_branch
          %253 = sbr.rel (%p251) target = $region44
        $region43: #{tpu_custom_call.1} parent=39 // pred_region
          %s254 = sand.u32 %s30, 1
          %s255 = scalar_lea.sflag [#allocation4], %s254
          %s256 = sand.u32 %s30, 1
          %s257 = smul.addr %s256, 8
          %s258 = scalar_lea.vmem [#allocation3], %s257
          %s260 = ssub.s32 128, 128
          %261 = vsyncadd %s255, %s260
          %s262 = smul.addr %s20, 2
          %s263 = smul.addr %s262, 64
          %s264 = scalar_lea.hbm %s0, %s263
          %s266 = sshll.u32 %s258, 4
          %s267 = int_to_ptr.vmem [resolvable:$true] %s266
          %269 = dma.hbm_to_vmem [thread:$0]  %s264, 128, %s267, %s255
        $region44: #{tpu_custom_call.1} parent=39 // pred_fallthru
          _
      $region40: #{tpu_custom_call.1} parent=5 // pred_fallthru
        _
      %p270 = scmp.le.s32.totalorder 1, %s20
      %p271 = scmp.lt.s32.totalorder %s20, 3
      %p272 = pnand %p270, %p271
      %p273 = pneg %p272
      // Predicated region
      $region45: #{tpu_custom_call.1} parent=5 // pred_check
        _
      $region46: #{tpu_custom_call.1} parent=5 // pred_check_branch
        %275 = sbr.rel (%p272) target = $region48
      $region47: #{tpu_custom_call.1} parent=5 // pred_region
        %s276 = ssub.s32 %s20, 1
        %s277 = sand.u32 %s33, 1
        %s278 = scalar_lea.sflag [#allocation4], %s277
        %s279 = sand.u32 %s33, 1
        %s280 = smul.addr %s279, 8
        %s281 = scalar_lea.vmem [#allocation3], %s280
        // Predicated region
        $region49: #{tpu_custom_call.1} parent=47 // pred_check
          %p282 = pneg %p46
        $region50: #{tpu_custom_call.1} parent=47 // pred_check_branch
          %284 = sbr.rel (%p282) target = $region52
        $region51: #{tpu_custom_call.1} parent=47 // pred_region
          %285 = dma.done %s278, 128
        $region52: #{tpu_custom_call.1} parent=47 // pred_fallthru
          _
        // Predicated region
        $region53: #{tpu_custom_call.1} parent=47 // pred_check
          %p286 = pneg %p88
        $region54: #{tpu_custom_call.1} parent=47 // pred_check_branch
          %288 = sbr.rel (%p286) target = $region56
        $region55: #{tpu_custom_call.1} parent=47 // pred_region
          %289 = dma.done [#allocation7], 16
        $region56: #{tpu_custom_call.1} parent=47 // pred_fallthru
          _
        // Predicated region
        $region57: #{tpu_custom_call.1} parent=47 // pred_check
          %p290 = pneg %p130
        $region58: #{tpu_custom_call.1} parent=47 // pred_check_branch
          %292 = sbr.rel (%p290) target = $region60
        $region59: #{tpu_custom_call.1} parent=47 // pred_region
          %293 = dma.done [#allocation7], 16
        $region60: #{tpu_custom_call.1} parent=47 // pred_fallthru
          _
        %s294 = sand.u32 %s33, 1
        %s295 = scalar_lea.sflag [#allocation4], %s294
        %s296 = sand.u32 %s33, 1
        %s297 = smul.addr %s296, 8
        %s298 = scalar_lea.vmem [#allocation3], %s297
        %p299 = pneg %p46
        %p300 = pneg %p43
        %p301 = pneg %p67
        %p302 = pneg %p64
        %p303 = pneg %p88
        %p304 = pneg %p85
        %p305 = pneg %p109
        %p306 = pneg %p106
        %p307 = pneg %p130
        %p308 = pneg %p127
        %p309 = pneg %p151
        %p310 = pneg %p148
        %p311 = pneg %p172
        %p312 = pneg %p169
        %p313 = pneg %p198
        %p314 = pneg %p195
        %s315 = sand.u32 %s185, 1
        %s316 = scalar_lea.sflag [#allocation5], %s315
        %s317 = sand.u32 %s185, 1
        %s318 = smul.addr %s317, 8
        %s319 = scalar_lea.vmem [#allocation9], %s318
        %320 = vst [vmem:[#allocation2] sm:$0xff] 0.0
        %321 = vst [vmem:[#allocation2 + $0x8] sm:$0xff] 0.0
        %322 = vst [vmem:[#allocation2 + $0x10] sm:$0x3] 0.0
        %s323 = scalar_lea.vmem [#allocation2], 408
        %324 = vst [vmem:[%s323] sm:$0xff] 0.0
        %325 = vst [vmem:[%s323 + $0x8] sm:$0xff] 0.0
        %326 = vst [vmem:[%s323 + $0x10] sm:$0x3] 0.0
        %327 = vst [vmem:[#allocation2] sm:$0x1] 0.0
        %328 = vst [vmem:[#allocation2 + $0x18] sm:$0x1] 0.0
        %329 = vst [vmem:[#allocation2 + $0x30] sm:$0x1] 0.0
        %330 = vst [vmem:[#allocation2 + $0x48] sm:$0x1] 0.0
        %331 = vst [vmem:[#allocation2 + $0x60] sm:$0x1] 0.0
        %332 = vst [vmem:[#allocation2 + $0x78] sm:$0x1] 0.0
        %333 = vst [vmem:[#allocation2 + $0x90] sm:$0x1] 0.0
        %334 = vst [vmem:[#allocation2 + $0xa8] sm:$0x1] 0.0
        %335 = vst [vmem:[#allocation2 + $0xc0] sm:$0x1] 0.0
        %336 = vst [vmem:[#allocation2 + $0xd8] sm:$0x1] 0.0
        %337 = vst [vmem:[#allocation2 + $0xf0] sm:$0x1] 0.0
        %338 = vst [vmem:[#allocation2 + $0x108] sm:$0x1] 0.0
        %339 = vst [vmem:[#allocation2 + $0x120] sm:$0x1] 0.0
        %340 = vst [vmem:[#allocation2 + $0x138] sm:$0x1] 0.0
        %341 = vst [vmem:[#allocation2 + $0x150] sm:$0x1] 0.0
        %342 = vst [vmem:[#allocation2 + $0x168] sm:$0x1] 0.0
        %343 = vst [vmem:[#allocation2 + $0x180] sm:$0x1] 0.0
        %344 = vst [vmem:[#allocation2 + $0x198] sm:$0x1] 0.0
        %345 = vst [vmem:[#allocation2 + $0x11] sm:$0x1] 0.0
        %346 = vst [vmem:[#allocation2 + $0x29] sm:$0x1] 0.0
        %347 = vst [vmem:[#allocation2 + $0x41] sm:$0x1] 0.0
        %348 = vst [vmem:[#allocation2 + $0x59] sm:$0x1] 0.0
        %349 = vst [vmem:[#allocation2 + $0x71] sm:$0x1] 0.0
        %350 = vst [vmem:[#allocation2 + $0x89] sm:$0x1] 0.0
        %351 = vst [vmem:[#allocation2 + $0xa1] sm:$0x1] 0.0
        %352 = vst [vmem:[#allocation2 + $0xb9] sm:$0x1] 0.0
        %353 = vst [vmem:[#allocation2 + $0xd1] sm:$0x1] 0.0
        %354 = vst [vmem:[#allocation2 + $0xe9] sm:$0x1] 0.0
        %355 = vst [vmem:[#allocation2 + $0x101] sm:$0x1] 0.0
        %356 = vst [vmem:[#allocation2 + $0x119] sm:$0x1] 0.0
        %357 = vst [vmem:[#allocation2 + $0x131] sm:$0x1] 0.0
        %358 = vst [vmem:[#allocation2 + $0x149] sm:$0x1] 0.0
        %359 = vst [vmem:[#allocation2 + $0x161] sm:$0x1] 0.0
        %360 = vst [vmem:[#allocation2 + $0x179] sm:$0x1] 0.0
        %361 = vst [vmem:[#allocation2 + $0x191] sm:$0x1] 0.0
        %362 = vst [vmem:[#allocation2 + $0x1a9] sm:$0x1] 0.0
        %v363 = vld [vmem:[%s281] sm:$0xff]
        %v364 = vld [vmem:[%s1] sm:$0xf]
        %v365 = vld [vmem:[#allocation6] sm:$0x1]
        %v367 = vlaneseq
        %v368 = vshrl.u32 %v367, 7
        %v369 = vsub.s32 0, %v368
        %v370 = vrot.slane %v365, %v369
        %v373 = vcombine.high %v363, %v363
        %375 = vxpose.xlu0.b32.start [1/16] %v363, 128
        %376 = vxpose.xlu0.b32.cont [2/16] 0.0, 128
        %377 = vxpose.xlu0.b32.cont [3/16] 0.0, 128
        %378 = vxpose.xlu0.b32.cont [4/16] 0.0, 128
        %379 = vxpose.xlu0.b32.cont [5/16] 0.0, 128
        %380 = vxpose.xlu0.b32.cont [6/16] 0.0, 128
        %381 = vxpose.xlu0.b32.cont [7/16] 0.0, 128
        %382 = vxpose.xlu0.b32.cont [8/16] 0.0, 128
        %383 = vxpose.xlu0.b32.cont [9/16] 0.0, 128
        %384 = vxpose.xlu0.b32.cont [10/16] 0.0, 128
        %385 = vxpose.xlu0.b32.cont [11/16] 0.0, 128
        %386 = vxpose.xlu0.b32.cont [12/16] 0.0, 128
        %387 = vxpose.xlu0.b32.cont [13/16] 0.0, 128
        %388 = vxpose.xlu0.b32.cont [14/16] 0.0, 128
        %389 = vxpose.xlu0.b32.cont [15/16] 0.0, 128
        %390 = vxpose.xlu0.b32.end [16/16] 0.0, 128
        %v391 = vpop.trf.xlu0
        %v392 = vpop.trf.xlu0
        %v393 = vpop.trf.xlu0
        %v394 = vpop.trf.xlu0
        %v395 = vpop.trf.xlu0
        %v396 = vpop.trf.xlu0
        %v397 = vpop.trf.xlu0
        %v398 = vpop.trf.xlu0
        %v399 = vpop.trf.xlu0
        %v400 = vpop.trf.xlu0
        %v401 = vpop.trf.xlu0
        %v402 = vpop.trf.xlu0
        %v403 = vpop.trf.xlu0
        %v404 = vpop.trf.xlu0
        %v405 = vpop.trf.xlu0
        %v406 = vpop.trf.xlu0
        %407 = vxpose.xlu0.b32.start [1/16] %v373, 128
        %408 = vxpose.xlu0.b32.cont [2/16] 0.0, 128
        %409 = vxpose.xlu0.b32.cont [3/16] 0.0, 128
        %410 = vxpose.xlu0.b32.cont [4/16] 0.0, 128
        %411 = vxpose.xlu0.b32.cont [5/16] 0.0, 128
        %412 = vxpose.xlu0.b32.cont [6/16] 0.0, 128
        %413 = vxpose.xlu0.b32.cont [7/16] 0.0, 128
        %414 = vxpose.xlu0.b32.cont [8/16] 0.0, 128
        %415 = vxpose.xlu0.b32.cont [9/16] 0.0, 128
        %416 = vxpose.xlu0.b32.cont [10/16] 0.0, 128
        %417 = vxpose.xlu0.b32.cont [11/16] 0.0, 128
        %418 = vxpose.xlu0.b32.cont [12/16] 0.0, 128
        %419 = vxpose.xlu0.b32.cont [13/16] 0.0, 128
        %420 = vxpose.xlu0.b32.cont [14/16] 0.0, 128
        %421 = vxpose.xlu0.b32.cont [15/16] 0.0, 128
        %422 = vxpose.xlu0.b32.end [16/16] 0.0, 128
        %v423 = vpop.trf.xlu0
        %v424 = vpop.trf.xlu0
        %v425 = vpop.trf.xlu0
        %v426 = vpop.trf.xlu0
        %v427 = vpop.trf.xlu0
        %v428 = vpop.trf.xlu0
        %v429 = vpop.trf.xlu0
        %v430 = vpop.trf.xlu0
        %v431 = vpop.trf.xlu0
        %v432 = vpop.trf.xlu0
        %v433 = vpop.trf.xlu0
        %v434 = vpop.trf.xlu0
        %v435 = vpop.trf.xlu0
        %v436 = vpop.trf.xlu0
        %v437 = vpop.trf.xlu0
        %v438 = vpop.trf.xlu0
        %vm439 = vcmask 31744
        %v441 = vsel %vm439, %v391, 0
        %v444 = vsel %vm439, %v392, 0
        %v447 = vsel %vm439, %v393, 0
        %v450 = vsel %vm439, %v394, 0
        %v453 = vsel %vm439, %v395, 0
        %v456 = vsel %vm439, %v396, 0
        %v459 = vsel %vm439, %v397, 0
        %v462 = vsel %vm439, %v398, 0
        %v465 = vsel %vm439, %v399, 0
        %v468 = vsel %vm439, %v400, 0
        %v471 = vsel %vm439, %v401, 0
        %v474 = vsel %vm439, %v402, 0
        %v477 = vsel %vm439, %v403, 0
        %v480 = vsel %vm439, %v404, 0
        %v483 = vsel %vm439, %v405, 0
        %v486 = vsel %vm439, %v406, 0
        %v489 = vsel %vm439, %v423, 0
        %v492 = vsel %vm439, %v424, 0
        %v495 = vsel %vm439, %v425, 0
        %v498 = vsel %vm439, %v426, 0
        %v501 = vsel %vm439, %v427, 0
        %v504 = vsel %vm439, %v428, 0
        %v507 = vsel %vm439, %v429, 0
        %v510 = vsel %vm439, %v430, 0
        %v513 = vsel %vm439, %v431, 0
        %v516 = vsel %vm439, %v432, 0
        %v519 = vsel %vm439, %v433, 0
        %v522 = vsel %vm439, %v434, 0
        %v525 = vsel %vm439, %v435, 0
        %v528 = vsel %vm439, %v436, 0
        %v531 = vsel %vm439, %v437, 0
        %v534 = vsel %vm439, %v438, 0
        %vm536 = vcmask 1043456
        %v538 = vsel %vm536, %v364, 0
        %540 = vmatprep.subr.mxu0 0.0
        %541 = vmatpush1.msra.mxu0 %v538
        %542 = vmatprep.subr.mxu0 0.0
        %543 = vmatpush1.msra.mxu0 0.0
        %544 = vmatprep.subr.mxu0 0.0
        %545 = vmatpush1.msra.mxu0 0.0
        %546 = vmatprep.subr.mxu0 0.0
        %547 = vmatpush1.msra.mxu0 0.0
        %548 = vmatprep.subr.mxu0 0.0
        %549 = vmatpush1.msra.mxu0 0.0
        %550 = vmatprep.subr.mxu0 0.0
        %551 = vmatpush1.msra.mxu0 0.0
        %552 = vmatprep.subr.mxu0 0.0
        %553 = vmatpush1.msra.mxu0 0.0
        %554 = vmatprep.subr.mxu0 0.0
        %555 = vmatpush1.msra.mxu0 0.0
        %556 = vmatprep.subr.mxu0 0.0
        %557 = vmatpush1.msra.mxu0 0.0
        %558 = vmatprep.subr.mxu0 0.0
        %559 = vmatpush1.msra.mxu0 0.0
        %560 = vmatprep.subr.mxu0 0.0
        %561 = vmatpush1.msra.mxu0 0.0
        %562 = vmatprep.subr.mxu0 0.0
        %563 = vmatpush1.msra.mxu0 0.0
        %564 = vmatprep.subr.mxu0 0.0
        %565 = vmatpush1.msra.mxu0 0.0
        %566 = vmatprep.subr.mxu0 0.0
        %567 = vmatpush1.msra.mxu0 0.0
        %568 = vmatprep.subr.mxu0 0.0
        %569 = vmatpush1.msra.mxu0 0.0
        %570 = vmatprep.subr.mxu0 0.0
        %571 = vmatpush1.msra.mxu0 0.0
        %572 = vmatprep.subr.mxu0 0.0
        %573 = vmatpush1.msra.mxu0 0.0
        %574 = vmatprep.subr.mxu0 0.0
        %575 = vmatpush1.msra.mxu0 0.0
        %576 = vmatprep.subr.mxu0 0.0
        %577 = vmatpush1.msra.mxu0 0.0
        %578 = vmatprep.subr.mxu0 0.0
        %579 = vmatpush1.msra.mxu0 0.0
        %580 = vmatprep.subr.mxu0 0.0
        %581 = vmatpush1.msra.mxu0 0.0
        %582 = vmatprep.subr.mxu0 0.0
        %583 = vmatpush1.msra.mxu0 0.0
        %584 = vmatprep.subr.mxu0 0.0
        %585 = vmatpush1.msra.mxu0 0.0
        %586 = vmatprep.subr.mxu0 0.0
        %587 = vmatpush1.msra.mxu0 0.0
        %588 = vmatprep.subr.mxu0 0.0
        %589 = vmatpush1.msra.mxu0 0.0
        %590 = vmatprep.subr.mxu0 0.0
        %591 = vmatpush1.msra.mxu0 0.0
        %592 = vmatprep.subr.mxu0 0.0
        %593 = vmatpush1.msra.mxu0 0.0
        %594 = vmatprep.subr.mxu0 0.0
        %595 = vmatpush1.msra.mxu0 0.0
        %596 = vmatprep.subr.mxu0 0.0
        %597 = vmatpush1.msra.mxu0 0.0
        %598 = vmatprep.subr.mxu0 0.0
        %599 = vmatpush1.msra.mxu0 0.0
        %600 = vmatprep.subr.mxu0 0.0
        %601 = vmatpush1.msra.mxu0 0.0
        %602 = vmatprep.subr.mxu0 0.0
        %603 = vmatpush1.msra.mxu0 0.0
        %604 = vmatprep.mubr.f32.mxu0 0.0
        %605 = vmatmul.mubr.f32.gmra.mrb[0].mxu0 %v441
        %v606 = vpop.f32.mrb[0].mxu0
        %v607 = vadd.f32 %v370, %v606
        %v608 = vpop.f32.mrb[0].mxu0
        %609 = vmatprep.mubr.f32.mxu0 0.0
        %610 = vmatmul.mubr.f32.gmra.mrb[0].mxu0 %v444
        %v611 = vpop.f32.mrb[0].mxu0
        %v612 = vadd.f32 %v370, %v611
        %v613 = vpop.f32.mrb[0].mxu0
        %614 = vmatprep.mubr.f32.mxu0 0.0
        %615 = vmatmul.mubr.f32.gmra.mrb[0].mxu0 %v447
        %v616 = vpop.f32.mrb[0].mxu0
        %v617 = vadd.f32 %v370, %v616
        %v618 = vpop.f32.mrb[0].mxu0
        %619 = vmatprep.mubr.f32.mxu0 0.0
        %620 = vmatmul.mubr.f32.gmra.mrb[0].mxu0 %v450
        %v621 = vpop.f32.mrb[0].mxu0
        %v622 = vadd.f32 %v370, %v621
        %v623 = vpop.f32.mrb[0].mxu0
        %624 = vmatprep.mubr.f32.mxu0 0.0
        %625 = vmatmul.mubr.f32.gmra.mrb[0].mxu0 %v453
        %v626 = vpop.f32.mrb[0].mxu0
        %v627 = vadd.f32 %v370, %v626
        %v628 = vpop.f32.mrb[0].mxu0
        %629 = vmatprep.mubr.f32.mxu0 0.0
        %630 = vmatmul.mubr.f32.gmra.mrb[0].mxu0 %v456
        %v631 = vpop.f32.mrb[0].mxu0
        %v632 = vadd.f32 %v370, %v631
        %v633 = vpop.f32.mrb[0].mxu0
        %634 = vmatprep.mubr.f32.mxu0 0.0
        %635 = vmatmul.mubr.f32.gmra.mrb[0].mxu0 %v459
        %v636 = vpop.f32.mrb[0].mxu0
        %v637 = vadd.f32 %v370, %v636
        %v638 = vpop.f32.mrb[0].mxu0
        %639 = vmatprep.mubr.f32.mxu0 0.0
        %640 = vmatmul.mubr.f32.gmra.mrb[0].mxu0 %v462
        %v641 = vpop.f32.mrb[0].mxu0
        %v642 = vadd.f32 %v370, %v641
        %v643 = vpop.f32.mrb[0].mxu0
        %644 = vmatprep.mubr.f32.mxu0 0.0
        %645 = vmatmul.mubr.f32.gmra.mrb[0].mxu0 %v465
        %v646 = vpop.f32.mrb[0].mxu0
        %v647 = vadd.f32 %v370, %v646
        %v648 = vpop.f32.mrb[0].mxu0
        %649 = vmatprep.mubr.f32.mxu0 0.0
        %650 = vmatmul.mubr.f32.gmra.mrb[0].mxu0 %v468
        %v651 = vpop.f32.mrb[0].mxu0
        %v652 = vadd.f32 %v370, %v651
        %v653 = vpop.f32.mrb[0].mxu0
        %654 = vmatprep.mubr.f32.mxu0 0.0
        %655 = vmatmul.mubr.f32.gmra.mrb[0].mxu0 %v471
        %v656 = vpop.f32.mrb[0].mxu0
        %v657 = vadd.f32 %v370, %v656
        %v658 = vpop.f32.mrb[0].mxu0
        %659 = vmatprep.mubr.f32.mxu0 0.0
        %660 = vmatmul.mubr.f32.gmra.mrb[0].mxu0 %v474
        %v661 = vpop.f32.mrb[0].mxu0
        %v662 = vadd.f32 %v370, %v661
        %v663 = vpop.f32.mrb[0].mxu0
        %664 = vmatprep.mubr.f32.mxu0 0.0
        %665 = vmatmul.mubr.f32.gmra.mrb[0].mxu0 %v477
        %v666 = vpop.f32.mrb[0].mxu0
        %v667 = vadd.f32 %v370, %v666
        %v668 = vpop.f32.mrb[0].mxu0
        %669 = vmatprep.mubr.f32.mxu0 0.0
        %670 = vmatmul.mubr.f32.gmra.mrb[0].mxu0 %v480
        %v671 = vpop.f32.mrb[0].mxu0
        %v672 = vadd.f32 %v370, %v671
        %v673 = vpop.f32.mrb[0].mxu0
        %674 = vmatprep.mubr.f32.mxu0 0.0
        %675 = vmatmul.mubr.f32.gmra.mrb[0].mxu0 %v483
        %v676 = vpop.f32.mrb[0].mxu0
        %v677 = vadd.f32 %v370, %v676
        %v678 = vpop.f32.mrb[0].mxu0
        %679 = vmatprep.mubr.f32.mxu0 0.0
        %680 = vmatmul.mubr.f32.gmra.mrb[0].mxu0 %v486
        %v681 = vpop.f32.mrb[0].mxu0
        %v682 = vadd.f32 %v370, %v681
        %v683 = vpop.f32.mrb[0].mxu0
        %684 = vmatprep.mubr.f32.mxu0 0.0
        %685 = vmatmul.mubr.f32.gmra.mrb[0].mxu0 %v489
        %v686 = vpop.f32.mrb[0].mxu0
        %v687 = vadd.f32 %v370, %v686
        %v688 = vpop.f32.mrb[0].mxu0
        %689 = vmatprep.mubr.f32.mxu0 0.0
        %690 = vmatmul.mubr.f32.gmra.mrb[0].mxu0 %v492
        %v691 = vpop.f32.mrb[0].mxu0
        %v692 = vadd.f32 %v370, %v691
        %v693 = vpop.f32.mrb[0].mxu0
        %694 = vmatprep.mubr.f32.mxu0 0.0
        %695 = vmatmul.mubr.f32.gmra.mrb[0].mxu0 %v495
        %v696 = vpop.f32.mrb[0].mxu0
        %v697 = vadd.f32 %v370, %v696
        %v698 = vpop.f32.mrb[0].mxu0
        %699 = vmatprep.mubr.f32.mxu0 0.0
        %700 = vmatmul.mubr.f32.gmra.mrb[0].mxu0 %v498
        %v701 = vpop.f32.mrb[0].mxu0
        %v702 = vadd.f32 %v370, %v701
        %v703 = vpop.f32.mrb[0].mxu0
        %704 = vmatprep.mubr.f32.mxu0 0.0
        %705 = vmatmul.mubr.f32.gmra.mrb[0].mxu0 %v501
        %v706 = vpop.f32.mrb[0].mxu0
        %v707 = vadd.f32 %v370, %v706
        %v708 = vpop.f32.mrb[0].mxu0
        %709 = vmatprep.mubr.f32.mxu0 0.0
        %710 = vmatmul.mubr.f32.gmra.mrb[0].mxu0 %v504
        %v711 = vpop.f32.mrb[0].mxu0
        %v712 = vadd.f32 %v370, %v711
        %v713 = vpop.f32.mrb[0].mxu0
        %714 = vmatprep.mubr.f32.mxu0 0.0
        %715 = vmatmul.mubr.f32.gmra.mrb[0].mxu0 %v507
        %v716 = vpop.f32.mrb[0].mxu0
        %v717 = vadd.f32 %v370, %v716
        %v718 = vpop.f32.mrb[0].mxu0
        %719 = vmatprep.mubr.f32.mxu0 0.0
        %720 = vmatmul.mubr.f32.gmra.mrb[0].mxu0 %v510
        %v721 = vpop.f32.mrb[0].mxu0
        %v722 = vadd.f32 %v370, %v721
        %v723 = vpop.f32.mrb[0].mxu0
        %724 = vmatprep.mubr.f32.mxu0 0.0
        %725 = vmatmul.mubr.f32.gmra.mrb[0].mxu0 %v513
        %v726 = vpop.f32.mrb[0].mxu0
        %v727 = vadd.f32 %v370, %v726
        %v728 = vpop.f32.mrb[0].mxu0
        %729 = vmatprep.mubr.f32.mxu0 0.0
        %730 = vmatmul.mubr.f32.gmra.mrb[0].mxu0 %v516
        %v731 = vpop.f32.mrb[0].mxu0
        %v732 = vadd.f32 %v370, %v731
        %v733 = vpop.f32.mrb[0].mxu0
        %734 = vmatprep.mubr.f32.mxu0 0.0
        %735 = vmatmul.mubr.f32.gmra.mrb[0].mxu0 %v519
        %v736 = vpop.f32.mrb[0].mxu0
        %v737 = vadd.f32 %v370, %v736
        %v738 = vpop.f32.mrb[0].mxu0
        %739 = vmatprep.mubr.f32.mxu0 0.0
        %740 = vmatmul.mubr.f32.gmra.mrb[0].mxu0 %v522
        %v741 = vpop.f32.mrb[0].mxu0
        %v742 = vadd.f32 %v370, %v741
        %v743 = vpop.f32.mrb[0].mxu0
        %744 = vmatprep.mubr.f32.mxu0 0.0
        %745 = vmatmul.mubr.f32.gmra.mrb[0].mxu0 %v525
        %v746 = vpop.f32.mrb[0].mxu0
        %v747 = vadd.f32 %v370, %v746
        %v748 = vpop.f32.mrb[0].mxu0
        %749 = vmatprep.mubr.f32.mxu0 0.0
        %750 = vmatmul.mubr.f32.gmra.mrb[0].mxu0 %v528
        %v751 = vpop.f32.mrb[0].mxu0
        %v752 = vadd.f32 %v370, %v751
        %v753 = vpop.f32.mrb[0].mxu0
        %754 = vmatprep.mubr.f32.mxu0 0.0
        %755 = vmatmul.mubr.f32.gmra.mrb[0].mxu0 %v531
        %v756 = vpop.f32.mrb[0].mxu0
        %v757 = vadd.f32 %v370, %v756
        %v758 = vpop.f32.mrb[0].mxu0
        %759 = vmatprep.mubr.f32.mxu0 0.0
        %760 = vmatmul.mubr.f32.gmra.mrb[0].mxu0 %v534
        %v761 = vpop.f32.mrb[0].mxu0
        %v762 = vadd.f32 %v370, %v761
        %v763 = vpop.f32.mrb[0].mxu0
        %764 = vdwg.mxu0
        %v765 = vmax.f32 %v607, 0.0
        %v766 = vmax.f32 %v612, 0.0
        %v767 = vmax.f32 %v617, 0.0
        %v768 = vmax.f32 %v622, 0.0
        %v769 = vmax.f32 %v627, 0.0
        %v770 = vmax.f32 %v632, 0.0
        %v771 = vmax.f32 %v637, 0.0
        %v772 = vmax.f32 %v642, 0.0
        %v773 = vmax.f32 %v647, 0.0
        %v774 = vmax.f32 %v652, 0.0
        %v775 = vmax.f32 %v657, 0.0
        %v776 = vmax.f32 %v662, 0.0
        %v777 = vmax.f32 %v667, 0.0
        %v778 = vmax.f32 %v672, 0.0
        %v779 = vmax.f32 %v677, 0.0
        %v780 = vmax.f32 %v682, 0.0
        %v781 = vmax.f32 %v687, 0.0
        %v782 = vmax.f32 %v692, 0.0
        %v783 = vmax.f32 %v697, 0.0
        %v784 = vmax.f32 %v702, 0.0
        %v785 = vmax.f32 %v707, 0.0
        %v786 = vmax.f32 %v712, 0.0
        %v787 = vmax.f32 %v717, 0.0
        %v788 = vmax.f32 %v722, 0.0
        %v789 = vmax.f32 %v727, 0.0
        %v790 = vmax.f32 %v732, 0.0
        %v791 = vmax.f32 %v737, 0.0
        %v792 = vmax.f32 %v742, 0.0
        %v793 = vmax.f32 %v747, 0.0
        %v794 = vmax.f32 %v752, 0.0
        %v795 = vmax.f32 %v757, 0.0
        %v796 = vmax.f32 %v762, 0.0
        %v797 = vmin.f32 %v765, 6.0
        %v798 = vmin.f32 %v766, 6.0
        %v799 = vmin.f32 %v767, 6.0
        %v800 = vmin.f32 %v768, 6.0
        %v801 = vmin.f32 %v769, 6.0
        %v802 = vmin.f32 %v770, 6.0
        %v803 = vmin.f32 %v771, 6.0
        %v804 = vmin.f32 %v772, 6.0
        %v805 = vmin.f32 %v773, 6.0
        %v806 = vmin.f32 %v774, 6.0
        %v807 = vmin.f32 %v775, 6.0
        %v808 = vmin.f32 %v776, 6.0
        %v809 = vmin.f32 %v777, 6.0
        %v810 = vmin.f32 %v778, 6.0
        %v811 = vmin.f32 %v779, 6.0
        %v812 = vmin.f32 %v780, 6.0
        %v813 = vmin.f32 %v781, 6.0
        %v814 = vmin.f32 %v782, 6.0
        %v815 = vmin.f32 %v783, 6.0
        %v816 = vmin.f32 %v784, 6.0
        %v817 = vmin.f32 %v785, 6.0
        %v818 = vmin.f32 %v786, 6.0
        %v819 = vmin.f32 %v787, 6.0
        %v820 = vmin.f32 %v788, 6.0
        %v821 = vmin.f32 %v789, 6.0
        %v822 = vmin.f32 %v790, 6.0
        %v823 = vmin.f32 %v791, 6.0
        %v824 = vmin.f32 %v792, 6.0
        %v825 = vmin.f32 %v793, 6.0
        %v826 = vmin.f32 %v794, 6.0
        %v827 = vmin.f32 %v795, 6.0
        %v828 = vmin.f32 %v796, 6.0
        %s829 = scalar_lea.vmem [#allocation2], 24
        %830 = vst [vmem:[%s829 + $0x1] sm:$0xff] %v797
        %831 = vst [vmem:[%s829 + $0x9] sm:$0xff] %v798
        %832 = vst [vmem:[%s829 + $0x19] sm:$0xff] %v799
        %833 = vst [vmem:[%s829 + $0x21] sm:$0xff] %v800
        %834 = vst [vmem:[%s829 + $0x31] sm:$0xff] %v801
        %835 = vst [vmem:[%s829 + $0x39] sm:$0xff] %v802
        %836 = vst [vmem:[%s829 + $0x49] sm:$0xff] %v803
        %837 = vst [vmem:[%s829 + $0x51] sm:$0xff] %v804
        %838 = vst [vmem:[%s829 + $0x61] sm:$0xff] %v805
        %839 = vst [vmem:[%s829 + $0x69] sm:$0xff] %v806
        %840 = vst [vmem:[%s829 + $0x79] sm:$0xff] %v807
        %841 = vst [vmem:[%s829 + $0x81] sm:$0xff] %v808
        %842 = vst [vmem:[%s829 + $0x91] sm:$0xff] %v809
        %843 = vst [vmem:[%s829 + $0x99] sm:$0xff] %v810
        %844 = vst [vmem:[%s829 + $0xa9] sm:$0xff] %v811
        %845 = vst [vmem:[%s829 + $0xb1] sm:$0xff] %v812
        %846 = vst [vmem:[%s829 + $0xc1] sm:$0xff] %v813
        %847 = vst [vmem:[%s829 + $0xc9] sm:$0xff] %v814
        %848 = vst [vmem:[%s829 + $0xd9] sm:$0xff] %v815
        %849 = vst [vmem:[%s829 + $0xe1] sm:$0xff] %v816
        %850 = vst [vmem:[%s829 + $0xf1] sm:$0xff] %v817
        %851 = vst [vmem:[%s829 + $0xf9] sm:$0xff] %v818
        %852 = vst [vmem:[%s829 + $0x109] sm:$0xff] %v819
        %853 = vst [vmem:[%s829 + $0x111] sm:$0xff] %v820
        %854 = vst [vmem:[%s829 + $0x121] sm:$0xff] %v821
        %855 = vst [vmem:[%s829 + $0x129] sm:$0xff] %v822
        %856 = vst [vmem:[%s829 + $0x139] sm:$0xff] %v823
        %857 = vst [vmem:[%s829 + $0x141] sm:$0xff] %v824
        %858 = vst [vmem:[%s829 + $0x151] sm:$0xff] %v825
        %859 = vst [vmem:[%s829 + $0x159] sm:$0xff] %v826
        %860 = vst [vmem:[%s829 + $0x169] sm:$0xff] %v827
        %861 = vst [vmem:[%s829 + $0x171] sm:$0xff] %v828
        %v862 = vld [vmem:[%s3] sm:$0x7]
        %v863 = vld [vmem:[%s3 + $0x4] sm:$0x7]
        %v864 = vld [vmem:[%s3 + $0x8] sm:$0x7]
        %v865 = vld [vmem:[#allocation8] sm:$0x1]
        %v866 = vld [vmem:[%s5] sm:$0xf]
        %v867 = vld [vmem:[%s6] sm:$0xf]
        loop: start=0, step=1, limit=2
        $region61: #{tpu_custom_call.1} parent=47 // loop_pre_header
          _
        $region62: #{tpu_custom_call.1} parent=47 // loop_header
          %s869 = sphi 0, %s873
          %p870 = scmp.ge.s32.totalorder %s869, 2
        $region63: #{tpu_custom_call.1} parent=47 // loop_header_branch
          %872 = sbr.rel (%p870) target = $region67
        $region64: #{tpu_custom_call.1} parent=47 // loop_body
          %s874 = smul.u32 %s869, 8
          %s875 = smul.u32 %s874, 24
          %s876 = scalar_lea.vmem [#allocation2], %s875
          %v877 = vld [vmem:[%s876] sm:$0xff]
          %v878 = vld [vmem:[%s876 + $0x8] sm:$0xff]
          %v879 = vld [vmem:[%s876 + $0x18] sm:$0xff]
          %v880 = vld [vmem:[%s876 + $0x20] sm:$0xff]
          %v881 = vld [vmem:[%s876 + $0x30] sm:$0xff]
          %v882 = vld [vmem:[%s876 + $0x38] sm:$0xff]
          %v883 = vld [vmem:[%s876 + $0x48] sm:$0xff]
          %v884 = vld [vmem:[%s876 + $0x50] sm:$0xff]
          %v885 = vld [vmem:[%s876 + $0x60] sm:$0xff]
          %v886 = vld [vmem:[%s876 + $0x68] sm:$0xff]
          %v887 = vld [vmem:[%s876 + $0x78] sm:$0xff]
          %v888 = vld [vmem:[%s876 + $0x80] sm:$0xff]
          %v889 = vld [vmem:[%s876 + $0x90] sm:$0xff]
          %v890 = vld [vmem:[%s876 + $0x98] sm:$0xff]
          %v891 = vld [vmem:[%s876 + $0xa8] sm:$0xff]
          %v892 = vld [vmem:[%s876 + $0xb0] sm:$0xff]
          %v893 = vlaneseq
          %v894 = vshrl.u32 %v893, 7
          %v895 = vsub.s32 0, %v894
          %v896 = vrot.slane %v862, %v895
          %v897 = vmul.f32 %v877, %v896
          %v898 = vmul.f32 %v878, %v896
          %v899 = vmul.f32 %v879, %v896
          %v900 = vmul.f32 %v880, %v896
          %v901 = vmul.f32 %v881, %v896
          %v902 = vmul.f32 %v882, %v896
          %v903 = vmul.f32 %v883, %v896
          %v904 = vmul.f32 %v884, %v896
          %v905 = vmul.f32 %v885, %v896
          %v906 = vmul.f32 %v886, %v896
          %v907 = vmul.f32 %v887, %v896
          %v908 = vmul.f32 %v888, %v896
          %v909 = vmul.f32 %v889, %v896
          %v910 = vmul.f32 %v890, %v896
          %v911 = vmul.f32 %v891, %v896
          %v912 = vmul.f32 %v892, %v896
          %v913 = vadd.f32 %v897, 0.0
          %v914 = vadd.f32 %v898, 0.0
          %v915 = vadd.f32 %v899, 0.0
          %v916 = vadd.f32 %v900, 0.0
          %v917 = vadd.f32 %v901, 0.0
          %v918 = vadd.f32 %v902, 0.0
          %v919 = vadd.f32 %v903, 0.0
          %v920 = vadd.f32 %v904, 0.0
          %v921 = vadd.f32 %v905, 0.0
          %v922 = vadd.f32 %v906, 0.0
          %v923 = vadd.f32 %v907, 0.0
          %v924 = vadd.f32 %v908, 0.0
          %v925 = vadd.f32 %v909, 0.0
          %v926 = vadd.f32 %v910, 0.0
          %v927 = vadd.f32 %v911, 0.0
          %v928 = vadd.f32 %v912, 0.0
          %v929 = vld [vmem:[%s876 + $0x1] sm:$0xff]
          %v930 = vld [vmem:[%s876 + $0x9] sm:$0xff]
          %v931 = vld [vmem:[%s876 + $0x19] sm:$0xff]
          %v932 = vld [vmem:[%s876 + $0x21] sm:$0xff]
          %v933 = vld [vmem:[%s876 + $0x31] sm:$0xff]
          %v934 = vld [vmem:[%s876 + $0x39] sm:$0xff]
          %v935 = vld [vmem:[%s876 + $0x49] sm:$0xff]
          %v936 = vld [vmem:[%s876 + $0x51] sm:$0xff]
          %v937 = vld [vmem:[%s876 + $0x61] sm:$0xff]
          %v938 = vld [vmem:[%s876 + $0x69] sm:$0xff]
          %v939 = vld [vmem:[%s876 + $0x79] sm:$0xff]
          %v940 = vld [vmem:[%s876 + $0x81] sm:$0xff]
          %v941 = vld [vmem:[%s876 + $0x91] sm:$0xff]
          %v942 = vld [vmem:[%s876 + $0x99] sm:$0xff]
          %v943 = vld [vmem:[%s876 + $0xa9] sm:$0xff]
          %v944 = vld [vmem:[%s876 + $0xb1] sm:$0xff]
          %v945 = vlaneseq
          %v946 = vshrl.u32 %v945, 7
          %v947 = vsub.s32 1, %v946
          %v948 = vrot.slane %v862, %v947
          %v949 = vmul.f32 %v929, %v948
          %v950 = vmul.f32 %v930, %v948
          %v951 = vmul.f32 %v931, %v948
          %v952 = vmul.f32 %v932, %v948
          %v953 = vmul.f32 %v933, %v948
          %v954 = vmul.f32 %v934, %v948
          %v955 = vmul.f32 %v935, %v948
          %v956 = vmul.f32 %v936, %v948
          %v957 = vmul.f32 %v937, %v948
          %v958 = vmul.f32 %v938, %v948
          %v959 = vmul.f32 %v939, %v948
          %v960 = vmul.f32 %v940, %v948
          %v961 = vmul.f32 %v941, %v948
          %v962 = vmul.f32 %v942, %v948
          %v963 = vmul.f32 %v943, %v948
          %v964 = vmul.f32 %v944, %v948
          %v965 = vadd.f32 %v913, %v949
          %v966 = vadd.f32 %v914, %v950
          %v967 = vadd.f32 %v915, %v951
          %v968 = vadd.f32 %v916, %v952
          %v969 = vadd.f32 %v917, %v953
          %v970 = vadd.f32 %v918, %v954
          %v971 = vadd.f32 %v919, %v955
          %v972 = vadd.f32 %v920, %v956
          %v973 = vadd.f32 %v921, %v957
          %v974 = vadd.f32 %v922, %v958
          %v975 = vadd.f32 %v923, %v959
          %v976 = vadd.f32 %v924, %v960
          %v977 = vadd.f32 %v925, %v961
          %v978 = vadd.f32 %v926, %v962
          %v979 = vadd.f32 %v927, %v963
          %v980 = vadd.f32 %v928, %v964
          %v981 = vld [vmem:[%s876 + $0x2] sm:$0xff]
          %v982 = vld [vmem:[%s876 + $0xa] sm:$0xff]
          %v983 = vld [vmem:[%s876 + $0x1a] sm:$0xff]
          %v984 = vld [vmem:[%s876 + $0x22] sm:$0xff]
          %v985 = vld [vmem:[%s876 + $0x32] sm:$0xff]
          %v986 = vld [vmem:[%s876 + $0x3a] sm:$0xff]
          %v987 = vld [vmem:[%s876 + $0x4a] sm:$0xff]
          %v988 = vld [vmem:[%s876 + $0x52] sm:$0xff]
          %v989 = vld [vmem:[%s876 + $0x62] sm:$0xff]
          %v990 = vld [vmem:[%s876 + $0x6a] sm:$0xff]
          %v991 = vld [vmem:[%s876 + $0x7a] sm:$0xff]
          %v992 = vld [vmem:[%s876 + $0x82] sm:$0xff]
          %v993 = vld [vmem:[%s876 + $0x92] sm:$0xff]
          %v994 = vld [vmem:[%s876 + $0x9a] sm:$0xff]
          %v995 = vld [vmem:[%s876 + $0xaa] sm:$0xff]
          %v996 = vld [vmem:[%s876 + $0xb2] sm:$0xff]
          %v997 = vlaneseq
          %v998 = vshrl.u32 %v997, 7
          %v999 = vsub.s32 2, %v998
          %v1000 = vrot.slane %v862, %v999
          %v1001 = vmul.f32 %v981, %v1000
          %v1002 = vmul.f32 %v982, %v1000
          %v1003 = vmul.f32 %v983, %v1000
          %v1004 = vmul.f32 %v984, %v1000
          %v1005 = vmul.f32 %v985, %v1000
          %v1006 = vmul.f32 %v986, %v1000
          %v1007 = vmul.f32 %v987, %v1000
          %v1008 = vmul.f32 %v988, %v1000
          %v1009 = vmul.f32 %v989, %v1000
          %v1010 = vmul.f32 %v990, %v1000
          %v1011 = vmul.f32 %v991, %v1000
          %v1012 = vmul.f32 %v992, %v1000
          %v1013 = vmul.f32 %v993, %v1000
          %v1014 = vmul.f32 %v994, %v1000
          %v1015 = vmul.f32 %v995, %v1000
          %v1016 = vmul.f32 %v996, %v1000
          %v1017 = vadd.f32 %v965, %v1001
          %v1018 = vadd.f32 %v966, %v1002
          %v1019 = vadd.f32 %v967, %v1003
          %v1020 = vadd.f32 %v968, %v1004
          %v1021 = vadd.f32 %v969, %v1005
          %v1022 = vadd.f32 %v970, %v1006
          %v1023 = vadd.f32 %v971, %v1007
          %v1024 = vadd.f32 %v972, %v1008
          %v1025 = vadd.f32 %v973, %v1009
          %v1026 = vadd.f32 %v974, %v1010
          %v1027 = vadd.f32 %v975, %v1011
          %v1028 = vadd.f32 %v976, %v1012
          %v1029 = vadd.f32 %v977, %v1013
          %v1030 = vadd.f32 %v978, %v1014
          %v1031 = vadd.f32 %v979, %v1015
          %v1032 = vadd.f32 %v980, %v1016
          %s1033 = sadd.s32 %s874, 1
          %s1034 = smul.u32 %s1033, 24
          %s1035 = scalar_lea.vmem [#allocation2], %s1034
          %v1036 = vld [vmem:[%s1035] sm:$0xff]
          %v1037 = vld [vmem:[%s1035 + $0x8] sm:$0xff]
          %v1038 = vld [vmem:[%s1035 + $0x18] sm:$0xff]
          %v1039 = vld [vmem:[%s1035 + $0x20] sm:$0xff]
          %v1040 = vld [vmem:[%s1035 + $0x30] sm:$0xff]
          %v1041 = vld [vmem:[%s1035 + $0x38] sm:$0xff]
          %v1042 = vld [vmem:[%s1035 + $0x48] sm:$0xff]
          %v1043 = vld [vmem:[%s1035 + $0x50] sm:$0xff]
          %v1044 = vld [vmem:[%s1035 + $0x60] sm:$0xff]
          %v1045 = vld [vmem:[%s1035 + $0x68] sm:$0xff]
          %v1046 = vld [vmem:[%s1035 + $0x78] sm:$0xff]
          %v1047 = vld [vmem:[%s1035 + $0x80] sm:$0xff]
          %v1048 = vld [vmem:[%s1035 + $0x90] sm:$0xff]
          %v1049 = vld [vmem:[%s1035 + $0x98] sm:$0xff]
          %v1050 = vld [vmem:[%s1035 + $0xa8] sm:$0xff]
          %v1051 = vld [vmem:[%s1035 + $0xb0] sm:$0xff]
          %v1052 = vlaneseq
          %v1053 = vshrl.u32 %v1052, 7
          %v1054 = vsub.s32 0, %v1053
          %v1055 = vrot.slane %v863, %v1054
          %v1056 = vmul.f32 %v1036, %v1055
          %v1057 = vmul.f32 %v1037, %v1055
          %v1058 = vmul.f32 %v1038, %v1055
          %v1059 = vmul.f32 %v1039, %v1055
          %v1060 = vmul.f32 %v1040, %v1055
          %v1061 = vmul.f32 %v1041, %v1055
          %v1062 = vmul.f32 %v1042, %v1055
          %v1063 = vmul.f32 %v1043, %v1055
          %v1064 = vmul.f32 %v1044, %v1055
          %v1065 = vmul.f32 %v1045, %v1055
          %v1066 = vmul.f32 %v1046, %v1055
          %v1067 = vmul.f32 %v1047, %v1055
          %v1068 = vmul.f32 %v1048, %v1055
          %v1069 = vmul.f32 %v1049, %v1055
          %v1070 = vmul.f32 %v1050, %v1055
          %v1071 = vmul.f32 %v1051, %v1055
          %v1072 = vadd.f32 %v1017, %v1056
          %v1073 = vadd.f32 %v1018, %v1057
          %v1074 = vadd.f32 %v1019, %v1058
          %v1075 = vadd.f32 %v1020, %v1059
          %v1076 = vadd.f32 %v1021, %v1060
          %v1077 = vadd.f32 %v1022, %v1061
          %v1078 = vadd.f32 %v1023, %v1062
          %v1079 = vadd.f32 %v1024, %v1063
          %v1080 = vadd.f32 %v1025, %v1064
          %v1081 = vadd.f32 %v1026, %v1065
          %v1082 = vadd.f32 %v1027, %v1066
          %v1083 = vadd.f32 %v1028, %v1067
          %v1084 = vadd.f32 %v1029, %v1068
          %v1085 = vadd.f32 %v1030, %v1069
          %v1086 = vadd.f32 %v1031, %v1070
          %v1087 = vadd.f32 %v1032, %v1071
          %v1088 = vld [vmem:[%s1035 + $0x1] sm:$0xff]
          %v1089 = vld [vmem:[%s1035 + $0x9] sm:$0xff]
          %v1090 = vld [vmem:[%s1035 + $0x19] sm:$0xff]
          %v1091 = vld [vmem:[%s1035 + $0x21] sm:$0xff]
          %v1092 = vld [vmem:[%s1035 + $0x31] sm:$0xff]
          %v1093 = vld [vmem:[%s1035 + $0x39] sm:$0xff]
          %v1094 = vld [vmem:[%s1035 + $0x49] sm:$0xff]
          %v1095 = vld [vmem:[%s1035 + $0x51] sm:$0xff]
          %v1096 = vld [vmem:[%s1035 + $0x61] sm:$0xff]
          %v1097 = vld [vmem:[%s1035 + $0x69] sm:$0xff]
          %v1098 = vld [vmem:[%s1035 + $0x79] sm:$0xff]
          %v1099 = vld [vmem:[%s1035 + $0x81] sm:$0xff]
          %v1100 = vld [vmem:[%s1035 + $0x91] sm:$0xff]
          %v1101 = vld [vmem:[%s1035 + $0x99] sm:$0xff]
          %v1102 = vld [vmem:[%s1035 + $0xa9] sm:$0xff]
          %v1103 = vld [vmem:[%s1035 + $0xb1] sm:$0xff]
          %v1104 = vlaneseq
          %v1105 = vshrl.u32 %v1104, 7
          %v1106 = vsub.s32 1, %v1105
          %v1107 = vrot.slane %v863, %v1106
          %v1108 = vmul.f32 %v1088, %v1107
          %v1109 = vmul.f32 %v1089, %v1107
          %v1110 = vmul.f32 %v1090, %v1107
          %v1111 = vmul.f32 %v1091, %v1107
          %v1112 = vmul.f32 %v1092, %v1107
          %v1113 = vmul.f32 %v1093, %v1107
          %v1114 = vmul.f32 %v1094, %v1107
          %v1115 = vmul.f32 %v1095, %v1107
          %v1116 = vmul.f32 %v1096, %v1107
          %v1117 = vmul.f32 %v1097, %v1107
          %v1118 = vmul.f32 %v1098, %v1107
          %v1119 = vmul.f32 %v1099, %v1107
          %v1120 = vmul.f32 %v1100, %v1107
          %v1121 = vmul.f32 %v1101, %v1107
          %v1122 = vmul.f32 %v1102, %v1107
          %v1123 = vmul.f32 %v1103, %v1107
          %v1124 = vadd.f32 %v1072, %v1108
          %v1125 = vadd.f32 %v1073, %v1109
          %v1126 = vadd.f32 %v1074, %v1110
          %v1127 = vadd.f32 %v1075, %v1111
          %v1128 = vadd.f32 %v1076, %v1112
          %v1129 = vadd.f32 %v1077, %v1113
          %v1130 = vadd.f32 %v1078, %v1114
          %v1131 = vadd.f32 %v1079, %v1115
          %v1132 = vadd.f32 %v1080, %v1116
          %v1133 = vadd.f32 %v1081, %v1117
          %v1134 = vadd.f32 %v1082, %v1118
          %v1135 = vadd.f32 %v1083, %v1119
          %v1136 = vadd.f32 %v1084, %v1120
          %v1137 = vadd.f32 %v1085, %v1121
          %v1138 = vadd.f32 %v1086, %v1122
          %v1139 = vadd.f32 %v1087, %v1123
          %v1140 = vld [vmem:[%s1035 + $0x2] sm:$0xff]
          %v1141 = vld [vmem:[%s1035 + $0xa] sm:$0xff]
          %v1142 = vld [vmem:[%s1035 + $0x1a] sm:$0xff]
          %v1143 = vld [vmem:[%s1035 + $0x22] sm:$0xff]
          %v1144 = vld [vmem:[%s1035 + $0x32] sm:$0xff]
          %v1145 = vld [vmem:[%s1035 + $0x3a] sm:$0xff]
          %v1146 = vld [vmem:[%s1035 + $0x4a] sm:$0xff]
          %v1147 = vld [vmem:[%s1035 + $0x52] sm:$0xff]
          %v1148 = vld [vmem:[%s1035 + $0x62] sm:$0xff]
          %v1149 = vld [vmem:[%s1035 + $0x6a] sm:$0xff]
          %v1150 = vld [vmem:[%s1035 + $0x7a] sm:$0xff]
          %v1151 = vld [vmem:[%s1035 + $0x82] sm:$0xff]
          %v1152 = vld [vmem:[%s1035 + $0x92] sm:$0xff]
          %v1153 = vld [vmem:[%s1035 + $0x9a] sm:$0xff]
          %v1154 = vld [vmem:[%s1035 + $0xaa] sm:$0xff]
          %v1155 = vld [vmem:[%s1035 + $0xb2] sm:$0xff]
          %v1156 = vlaneseq
          %v1157 = vshrl.u32 %v1156, 7
          %v1158 = vsub.s32 2, %v1157
          %v1159 = vrot.slane %v863, %v1158
          %v1160 = vmul.f32 %v1140, %v1159
          %v1161 = vmul.f32 %v1141, %v1159
          %v1162 = vmul.f32 %v1142, %v1159
          %v1163 = vmul.f32 %v1143, %v1159
          %v1164 = vmul.f32 %v1144, %v1159
          %v1165 = vmul.f32 %v1145, %v1159
          %v1166 = vmul.f32 %v1146, %v1159
          %v1167 = vmul.f32 %v1147, %v1159
          %v1168 = vmul.f32 %v1148, %v1159
          %v1169 = vmul.f32 %v1149, %v1159
          %v1170 = vmul.f32 %v1150, %v1159
          %v1171 = vmul.f32 %v1151, %v1159
          %v1172 = vmul.f32 %v1152, %v1159
          %v1173 = vmul.f32 %v1153, %v1159
          %v1174 = vmul.f32 %v1154, %v1159
          %v1175 = vmul.f32 %v1155, %v1159
          %v1176 = vadd.f32 %v1124, %v1160
          %v1177 = vadd.f32 %v1125, %v1161
          %v1178 = vadd.f32 %v1126, %v1162
          %v1179 = vadd.f32 %v1127, %v1163
          %v1180 = vadd.f32 %v1128, %v1164
          %v1181 = vadd.f32 %v1129, %v1165
          %v1182 = vadd.f32 %v1130, %v1166
          %v1183 = vadd.f32 %v1131, %v1167
          %v1184 = vadd.f32 %v1132, %v1168
          %v1185 = vadd.f32 %v1133, %v1169
          %v1186 = vadd.f32 %v1134, %v1170
          %v1187 = vadd.f32 %v1135, %v1171
          %v1188 = vadd.f32 %v1136, %v1172
          %v1189 = vadd.f32 %v1137, %v1173
          %v1190 = vadd.f32 %v1138, %v1174
          %v1191 = vadd.f32 %v1139, %v1175
          %s1192 = sadd.s32 %s874, 2
          %s1193 = smul.u32 %s1192, 24
          %s1194 = scalar_lea.vmem [#allocation2], %s1193
          %v1195 = vld [vmem:[%s1194] sm:$0xff]
          %v1196 = vld [vmem:[%s1194 + $0x8] sm:$0xff]
          %v1197 = vld [vmem:[%s1194 + $0x18] sm:$0xff]
          %v1198 = vld [vmem:[%s1194 + $0x20] sm:$0xff]
          %v1199 = vld [vmem:[%s1194 + $0x30] sm:$0xff]
          %v1200 = vld [vmem:[%s1194 + $0x38] sm:$0xff]
          %v1201 = vld [vmem:[%s1194 + $0x48] sm:$0xff]
          %v1202 = vld [vmem:[%s1194 + $0x50] sm:$0xff]
          %v1203 = vld [vmem:[%s1194 + $0x60] sm:$0xff]
          %v1204 = vld [vmem:[%s1194 + $0x68] sm:$0xff]
          %v1205 = vld [vmem:[%s1194 + $0x78] sm:$0xff]
          %v1206 = vld [vmem:[%s1194 + $0x80] sm:$0xff]
          %v1207 = vld [vmem:[%s1194 + $0x90] sm:$0xff]
          %v1208 = vld [vmem:[%s1194 + $0x98] sm:$0xff]
          %v1209 = vld [vmem:[%s1194 + $0xa8] sm:$0xff]
          %v1210 = vld [vmem:[%s1194 + $0xb0] sm:$0xff]
          %v1211 = vlaneseq
          %v1212 = vshrl.u32 %v1211, 7
          %v1213 = vsub.s32 0, %v1212
          %v1214 = vrot.slane %v864, %v1213
          %v1215 = vmul.f32 %v1195, %v1214
          %v1216 = vmul.f32 %v1196, %v1214
          %v1217 = vmul.f32 %v1197, %v1214
          %v1218 = vmul.f32 %v1198, %v1214
          %v1219 = vmul.f32 %v1199, %v1214
          %v1220 = vmul.f32 %v1200, %v1214
          %v1221 = vmul.f32 %v1201, %v1214
          %v1222 = vmul.f32 %v1202, %v1214
          %v1223 = vmul.f32 %v1203, %v1214
          %v1224 = vmul.f32 %v1204, %v1214
          %v1225 = vmul.f32 %v1205, %v1214
          %v1226 = vmul.f32 %v1206, %v1214
          %v1227 = vmul.f32 %v1207, %v1214
          %v1228 = vmul.f32 %v1208, %v1214
          %v1229 = vmul.f32 %v1209, %v1214
          %v1230 = vmul.f32 %v1210, %v1214
          %v1231 = vadd.f32 %v1176, %v1215
          %v1232 = vadd.f32 %v1177, %v1216
          %v1233 = vadd.f32 %v1178, %v1217
          %v1234 = vadd.f32 %v1179, %v1218
          %v1235 = vadd.f32 %v1180, %v1219
          %v1236 = vadd.f32 %v1181, %v1220
          %v1237 = vadd.f32 %v1182, %v1221
          %v1238 = vadd.f32 %v1183, %v1222
          %v1239 = vadd.f32 %v1184, %v1223
          %v1240 = vadd.f32 %v1185, %v1224
          %v1241 = vadd.f32 %v1186, %v1225
          %v1242 = vadd.f32 %v1187, %v1226
          %v1243 = vadd.f32 %v1188, %v1227
          %v1244 = vadd.f32 %v1189, %v1228
          %v1245 = vadd.f32 %v1190, %v1229
          %v1246 = vadd.f32 %v1191, %v1230
          %v1247 = vld [vmem:[%s1194 + $0x1] sm:$0xff]
          %v1248 = vld [vmem:[%s1194 + $0x9] sm:$0xff]
          %v1249 = vld [vmem:[%s1194 + $0x19] sm:$0xff]
          %v1250 = vld [vmem:[%s1194 + $0x21] sm:$0xff]
          %v1251 = vld [vmem:[%s1194 + $0x31] sm:$0xff]
          %v1252 = vld [vmem:[%s1194 + $0x39] sm:$0xff]
          %v1253 = vld [vmem:[%s1194 + $0x49] sm:$0xff]
          %v1254 = vld [vmem:[%s1194 + $0x51] sm:$0xff]
          %v1255 = vld [vmem:[%s1194 + $0x61] sm:$0xff]
          %v1256 = vld [vmem:[%s1194 + $0x69] sm:$0xff]
          %v1257 = vld [vmem:[%s1194 + $0x79] sm:$0xff]
          %v1258 = vld [vmem:[%s1194 + $0x81] sm:$0xff]
          %v1259 = vld [vmem:[%s1194 + $0x91] sm:$0xff]
          %v1260 = vld [vmem:[%s1194 + $0x99] sm:$0xff]
          %v1261 = vld [vmem:[%s1194 + $0xa9] sm:$0xff]
          %v1262 = vld [vmem:[%s1194 + $0xb1] sm:$0xff]
          %v1263 = vlaneseq
          %v1264 = vshrl.u32 %v1263, 7
          %v1265 = vsub.s32 1, %v1264
          %v1266 = vrot.slane %v864, %v1265
          %v1267 = vmul.f32 %v1247, %v1266
          %v1268 = vmul.f32 %v1248, %v1266
          %v1269 = vmul.f32 %v1249, %v1266
          %v1270 = vmul.f32 %v1250, %v1266
          %v1271 = vmul.f32 %v1251, %v1266
          %v1272 = vmul.f32 %v1252, %v1266
          %v1273 = vmul.f32 %v1253, %v1266
          %v1274 = vmul.f32 %v1254, %v1266
          %v1275 = vmul.f32 %v1255, %v1266
          %v1276 = vmul.f32 %v1256, %v1266
          %v1277 = vmul.f32 %v1257, %v1266
          %v1278 = vmul.f32 %v1258, %v1266
          %v1279 = vmul.f32 %v1259, %v1266
          %v1280 = vmul.f32 %v1260, %v1266
          %v1281 = vmul.f32 %v1261, %v1266
          %v1282 = vmul.f32 %v1262, %v1266
          %v1283 = vadd.f32 %v1231, %v1267
          %v1284 = vadd.f32 %v1232, %v1268
          %v1285 = vadd.f32 %v1233, %v1269
          %v1286 = vadd.f32 %v1234, %v1270
          %v1287 = vadd.f32 %v1235, %v1271
          %v1288 = vadd.f32 %v1236, %v1272
          %v1289 = vadd.f32 %v1237, %v1273
          %v1290 = vadd.f32 %v1238, %v1274
          %v1291 = vadd.f32 %v1239, %v1275
          %v1292 = vadd.f32 %v1240, %v1276
          %v1293 = vadd.f32 %v1241, %v1277
          %v1294 = vadd.f32 %v1242, %v1278
          %v1295 = vadd.f32 %v1243, %v1279
          %v1296 = vadd.f32 %v1244, %v1280
          %v1297 = vadd.f32 %v1245, %v1281
          %v1298 = vadd.f32 %v1246, %v1282
          %v1299 = vld [vmem:[%s1194 + $0x2] sm:$0xff]
          %v1300 = vld [vmem:[%s1194 + $0xa] sm:$0xff]
          %v1301 = vld [vmem:[%s1194 + $0x1a] sm:$0xff]
          %v1302 = vld [vmem:[%s1194 + $0x22] sm:$0xff]
          %v1303 = vld [vmem:[%s1194 + $0x32] sm:$0xff]
          %v1304 = vld [vmem:[%s1194 + $0x3a] sm:$0xff]
          %v1305 = vld [vmem:[%s1194 + $0x4a] sm:$0xff]
          %v1306 = vld [vmem:[%s1194 + $0x52] sm:$0xff]
          %v1307 = vld [vmem:[%s1194 + $0x62] sm:$0xff]
          %v1308 = vld [vmem:[%s1194 + $0x6a] sm:$0xff]
          %v1309 = vld [vmem:[%s1194 + $0x7a] sm:$0xff]
          %v1310 = vld [vmem:[%s1194 + $0x82] sm:$0xff]
          %v1311 = vld [vmem:[%s1194 + $0x92] sm:$0xff]
          %v1312 = vld [vmem:[%s1194 + $0x9a] sm:$0xff]
          %v1313 = vld [vmem:[%s1194 + $0xaa] sm:$0xff]
          %v1314 = vld [vmem:[%s1194 + $0xb2] sm:$0xff]
          %v1315 = vlaneseq
          %v1316 = vshrl.u32 %v1315, 7
          %v1317 = vsub.s32 2, %v1316
          %v1318 = vrot.slane %v864, %v1317
          %v1319 = vmul.f32 %v1299, %v1318
          %v1320 = vmul.f32 %v1300, %v1318
          %v1321 = vmul.f32 %v1301, %v1318
          %v1322 = vmul.f32 %v1302, %v1318
          %v1323 = vmul.f32 %v1303, %v1318
          %v1324 = vmul.f32 %v1304, %v1318
          %v1325 = vmul.f32 %v1305, %v1318
          %v1326 = vmul.f32 %v1306, %v1318
          %v1327 = vmul.f32 %v1307, %v1318
          %v1328 = vmul.f32 %v1308, %v1318
          %v1329 = vmul.f32 %v1309, %v1318
          %v1330 = vmul.f32 %v1310, %v1318
          %v1331 = vmul.f32 %v1311, %v1318
          %v1332 = vmul.f32 %v1312, %v1318
          %v1333 = vmul.f32 %v1313, %v1318
          %v1334 = vmul.f32 %v1314, %v1318
          %v1335 = vadd.f32 %v1283, %v1319
          %v1336 = vadd.f32 %v1284, %v1320
          %v1337 = vadd.f32 %v1285, %v1321
          %v1338 = vadd.f32 %v1286, %v1322
          %v1339 = vadd.f32 %v1287, %v1323
          %v1340 = vadd.f32 %v1288, %v1324
          %v1341 = vadd.f32 %v1289, %v1325
          %v1342 = vadd.f32 %v1290, %v1326
          %v1343 = vadd.f32 %v1291, %v1327
          %v1344 = vadd.f32 %v1292, %v1328
          %v1345 = vadd.f32 %v1293, %v1329
          %v1346 = vadd.f32 %v1294, %v1330
          %v1347 = vadd.f32 %v1295, %v1331
          %v1348 = vadd.f32 %v1296, %v1332
          %v1349 = vadd.f32 %v1297, %v1333
          %v1350 = vadd.f32 %v1298, %v1334
          %v1352 = vlaneseq
          %v1353 = vshrl.u32 %v1352, 7
          %v1354 = vsub.s32 0, %v1353
          %v1355 = vrot.slane %v865, %v1354
          %v1357 = vadd.f32 %v1335, %v1355
          %v1358 = vadd.f32 %v1336, %v1355
          %v1359 = vadd.f32 %v1337, %v1355
          %v1360 = vadd.f32 %v1338, %v1355
          %v1361 = vadd.f32 %v1339, %v1355
          %v1362 = vadd.f32 %v1340, %v1355
          %v1363 = vadd.f32 %v1341, %v1355
          %v1364 = vadd.f32 %v1342, %v1355
          %v1365 = vadd.f32 %v1343, %v1355
          %v1366 = vadd.f32 %v1344, %v1355
          %v1367 = vadd.f32 %v1345, %v1355
          %v1368 = vadd.f32 %v1346, %v1355
          %v1369 = vadd.f32 %v1347, %v1355
          %v1370 = vadd.f32 %v1348, %v1355
          %v1371 = vadd.f32 %v1349, %v1355
          %v1372 = vadd.f32 %v1350, %v1355
          %v1373 = vmax.f32 %v1357, 0.0
          %v1374 = vmax.f32 %v1358, 0.0
          %v1375 = vmax.f32 %v1359, 0.0
          %v1376 = vmax.f32 %v1360, 0.0
          %v1377 = vmax.f32 %v1361, 0.0
          %v1378 = vmax.f32 %v1362, 0.0
          %v1379 = vmax.f32 %v1363, 0.0
          %v1380 = vmax.f32 %v1364, 0.0
          %v1381 = vmax.f32 %v1365, 0.0
          %v1382 = vmax.f32 %v1366, 0.0
          %v1383 = vmax.f32 %v1367, 0.0
          %v1384 = vmax.f32 %v1368, 0.0
          %v1385 = vmax.f32 %v1369, 0.0
          %v1386 = vmax.f32 %v1370, 0.0
          %v1387 = vmax.f32 %v1371, 0.0
          %v1388 = vmax.f32 %v1372, 0.0
          %v1389 = vmin.f32 %v1373, 6.0
          %v1390 = vmin.f32 %v1374, 6.0
          %v1391 = vmin.f32 %v1375, 6.0
          %v1392 = vmin.f32 %v1376, 6.0
          %v1393 = vmin.f32 %v1377, 6.0
          %v1394 = vmin.f32 %v1378, 6.0
          %v1395 = vmin.f32 %v1379, 6.0
          %v1396 = vmin.f32 %v1380, 6.0
          %v1397 = vmin.f32 %v1381, 6.0
          %v1398 = vmin.f32 %v1382, 6.0
          %v1399 = vmin.f32 %v1383, 6.0
          %v1400 = vmin.f32 %v1384, 6.0
          %v1401 = vmin.f32 %v1385, 6.0
          %v1402 = vmin.f32 %v1386, 6.0
          %v1403 = vmin.f32 %v1387, 6.0
          %v1404 = vmin.f32 %v1388, 6.0
          %1406 = vset.pattern.permute.xlu0 0
          %1407 = vperm.xlu0 %1406, %v867
          %v1408 = vpop.permute.xlu0 %1407
          %1410 = vmatprep.subr.mxu0 0.0
          %1411 = vmatpush1.xpose.msra.mxu0 %v1389
          %1412 = vmatprep.subr.mxu0 0.0
          %1413 = vmatpush1.xpose.msra.mxu0 %v1390
          %1414 = vmatprep.subr.mxu0 0.0
          %1415 = vmatpush1.xpose.msra.mxu0 %v1391
          %1416 = vmatprep.subr.mxu0 0.0
          %1417 = vmatpush1.xpose.msra.mxu0 %v1392
          %1418 = vmatprep.subr.mxu0 0.0
          %1419 = vmatpush1.xpose.msra.mxu0 %v1393
          %1420 = vmatprep.subr.mxu0 0.0
          %1421 = vmatpush1.xpose.msra.mxu0 %v1394
          %1422 = vmatprep.subr.mxu0 0.0
          %1423 = vmatpush1.xpose.msra.mxu0 %v1395
          %1424 = vmatprep.subr.mxu0 0.0
          %1425 = vmatpush1.xpose.msra.mxu0 %v1396
          %1426 = vmatprep.subr.mxu0 0.0
          %1427 = vmatpush1.xpose.msra.mxu0 %v1397
          %1428 = vmatprep.subr.mxu0 0.0
          %1429 = vmatpush1.xpose.msra.mxu0 %v1398
          %1430 = vmatprep.subr.mxu0 0.0
          %1431 = vmatpush1.xpose.msra.mxu0 %v1399
          %1432 = vmatprep.subr.mxu0 0.0
          %1433 = vmatpush1.xpose.msra.mxu0 %v1400
          %1434 = vmatprep.subr.mxu0 0.0
          %1435 = vmatpush1.xpose.msra.mxu0 %v1401
          %1436 = vmatprep.subr.mxu0 0.0
          %1437 = vmatpush1.xpose.msra.mxu0 %v1402
          %1438 = vmatprep.subr.mxu0 0.0
          %1439 = vmatpush1.xpose.msra.mxu0 %v1403
          %1440 = vmatprep.subr.mxu0 0.0
          %1441 = vmatpush1.xpose.msra.mxu0 %v1404
          %1442 = vmatprep.subr.mxu0 0.0
          %1443 = vmatpush1.xpose.msra.mxu0 0.0
          %1444 = vmatprep.subr.mxu0 0.0
          %1445 = vmatpush1.xpose.msra.mxu0 0.0
          %1446 = vmatprep.subr.mxu0 0.0
          %1447 = vmatpush1.xpose.msra.mxu0 0.0
          %1448 = vmatprep.subr.mxu0 0.0
          %1449 = vmatpush1.xpose.msra.mxu0 0.0
          %1450 = vmatprep.subr.mxu0 0.0
          %1451 = vmatpush1.xpose.msra.mxu0 0.0
          %1452 = vmatprep.subr.mxu0 0.0
          %1453 = vmatpush1.xpose.msra.mxu0 0.0
          %1454 = vmatprep.subr.mxu0 0.0
          %1455 = vmatpush1.xpose.msra.mxu0 0.0
          %1456 = vmatprep.subr.mxu0 0.0
          %1457 = vmatpush1.xpose.msra.mxu0 0.0
          %1458 = vmatprep.subr.mxu0 0.0
          %1459 = vmatpush1.xpose.msra.mxu0 0.0
          %1460 = vmatprep.subr.mxu0 0.0
          %1461 = vmatpush1.xpose.msra.mxu0 0.0
          %1462 = vmatprep.subr.mxu0 0.0
          %1463 = vmatpush1.xpose.msra.mxu0 0.0
          %1464 = vmatprep.subr.mxu0 0.0
          %1465 = vmatpush1.xpose.msra.mxu0 0.0
          %1466 = vmatprep.subr.mxu0 0.0
          %1467 = vmatpush1.xpose.msra.mxu0 0.0
          %1468 = vmatprep.subr.mxu0 0.0
          %1469 = vmatpush1.xpose.msra.mxu0 0.0
          %1470 = vmatprep.subr.mxu0 0.0
          %1471 = vmatpush1.xpose.msra.mxu0 0.0
          %1472 = vmatprep.subr.mxu0 0.0
          %1473 = vmatpush1.xpose.msra.mxu0 0.0
          %1474 = vmatprep.mubr.f32.mxu0 0.0
          %1475 = vmatmul.mubr.f32.gmra.mrb[0].mxu0 %v866
          %v1476 = vpop.f32.mrb[0].mxu0
          %v1477 = vadd.f32 %v1408, %v1476
          %v1478 = vpop.f32.mrb[0].mxu0
          %1479 = vdwg.mxu0
          %s1480 = smul.u32 %s869, 128
          %s1481 = sshra.s32 %s1480, 7
          %s1482 = sand.u32 %s1480, 127
          %s1483 = smul.addr %s1481, 4
          %s1484 = scalar_lea.vmem %s281, %s1483 [#allocation3]
          %v1485 = vld [vmem:[%s1484] sm:$0xf]
          %v1486 = vadd.f32 %v1477, %v1485
          %s1487 = smul.addr %s1481, 4
          %s1488 = scalar_lea.vmem %s319, %s1487 [#allocation9]
          %1489 = vst [vmem:[%s1488] sm:$0xf] %v1486
        $region65: #{tpu_custom_call.1} parent=47 // loop_footer
          %s873 = sadd.s32 1, %s869
        $region66: #{tpu_custom_call.1} parent=47 // loop_footer_branch
          %868 = sbr.rel target = $region62
        $region67: #{tpu_custom_call.1} parent=47 // loop_exit
          _
        %s1490 = sand.u32 %s185, 1
        %s1491 = scalar_lea.sflag [#allocation5], %s1490
        %s1492 = sand.u32 %s185, 1
        %s1493 = smul.addr %s1492, 8
        %s1494 = scalar_lea.vmem [#allocation9], %s1493
        // Predicated region
        $region68: #{tpu_custom_call.1} parent=47 // pred_check
          %p1495 = pneg %p195
        $region69: #{tpu_custom_call.1} parent=47 // pred_check_branch
          %1497 = sbr.rel (%p1495) target = $region71
        $region70: #{tpu_custom_call.1} parent=47 // pred_region
          %s1499 = ssub.s32 128, 128
          %1500 = vsyncadd %s1491, %s1499
          %s1501 = smul.addr %s25, 2
          %s1502 = smul.addr %s1501, 64
          %s1503 = scalar_lea.hbm %s7, %s1502
          %s1505 = sshll.u32 %s1494, 4
          %s1506 = int_to_ptr.vmem [resolvable:$true] %s1505
          %1508 = dma.vmem_to_hbm [thread:$0]  %s1506, 128, %s1503, %s1491
        $region71: #{tpu_custom_call.1} parent=47 // pred_fallthru
          _
      $region48: #{tpu_custom_call.1} parent=5 // pred_fallthru
        _
      %p1509 = scmp.le.s32.totalorder 2, %s20
      // Predicated region
      $region72: #{tpu_custom_call.1} parent=5 // pred_check
        %p1510 = pneg %p1509
      $region73: #{tpu_custom_call.1} parent=5 // pred_check_branch
        %1512 = sbr.rel (%p1510) target = $region75
      $region74: #{tpu_custom_call.1} parent=5 // pred_region
        %s1513 = ssub.s32 %s20, 2
        // Predicated region
        $region76: #{tpu_custom_call.1} parent=74 // pred_check
          %p1514 = pneg %p201
        $region77: #{tpu_custom_call.1} parent=74 // pred_check_branch
          %1516 = sbr.rel (%p1514) target = $region79
        $region78: #{tpu_custom_call.1} parent=74 // pred_region
          %s1517 = sand.u32 %s186, 1
          %s1518 = scalar_lea.sflag [#allocation5], %s1517
          %s1519 = sand.u32 %s186, 1
          %s1520 = smul.addr %s1519, 8
          %s1521 = scalar_lea.vmem [#allocation9], %s1520
          %1522 = dma.done %s1518, 128
        $region79: #{tpu_custom_call.1} parent=74 // pred_fallthru
          _
      $region75: #{tpu_custom_call.1} parent=5 // pred_fallthru
        _
    $region6: #{tpu_custom_call.1} parent=1 // loop_footer
      %s24 = sadd.s32 1, %s20
    $region7: #{tpu_custom_call.1} parent=1 // loop_footer_branch
      %19 = sbr.rel target = $region3
    $region8: #{tpu_custom_call.1} parent=1 // loop_exit
      _
    %1523 = vsyncpa [#allocation4], 1
    %s1524 = scalar_lea.sflag [#allocation4], 1
    %1525 = vsyncpa %s1524, 1
    %1526 = vsyncpa [#allocation7], 1
    %1527 = vsyncpa [#allocation5], 1
    %s1528 = scalar_lea.sflag [#allocation5], 1
    %1529 = vsyncpa %s1528, 1

</llo_original>
